<compile_context>
chip_gen: v6e
topology: v6e:2x2x1
jax: 0.10.0
libtpu: 0.0.40
codegen_flags: <defaults>
</compile_context>

<pallas_src>
import jax
import jax.numpy as jnp
from jax.experimental import pallas as pl
from jax.experimental.pallas import tpu as pltpu


def _make_kernel(return_pf, mxu_dtype):
    """Build the kernel body.  Signature depends on whether pf is an output."""

    def kernel(
        x_ref,                    # (Bt, TN, 3)
        w1_ref, c1_ref,           # (3, 64),    (1, 64)      BN folded into W
        w2_ref, c2_ref,           # (64, 128),  (1, 128)
        w3_ref, c3_ref,           # (128, 256), (1, 256)
        w4_ref, c4_ref,           # (256, 128), (1, 128)
        w5_ref, b5_ref,           # (128, KPAD),(1, KPAD)    lane-dense padded head
        logp_ref,                 # (Bt, 1, KPAD) output: padded log-softmax slab
        *rest,                    # [pf_ref (Bt, TN, 256)], gmax scratch (Bt, 256)
    ):
        if return_pf:
            pf_ref, gmax_ref = rest
        else:
            (gmax_ref,) = rest
            pf_ref = None

        t = pl.program_id(1)
        nt = pl.num_programs(1)
        Bt, TN, _ = x_ref.shape

        @pl.when(t == 0)
        def _():
            gmax_ref[...] = jnp.full(gmax_ref.shape, -jnp.inf, dtype=gmax_ref.dtype)

        x = x_ref[...].reshape(Bt * TN, 3)                               # (M, 3)

        # feat.fc1 -> bn1 -> relu  (K=3: three VPU broadcast-FMAs, skip the MXU)
        w1 = w1_ref[...]                                                 # (3, 64)
        h1 = (x[:, 0:1] * w1[0:1, :]
              + x[:, 1:2] * w1[1:2, :]
              + x[:, 2:3] * w1[2:3, :]) + c1_ref[...]
        h1 = jnp.maximum(h1, 0.0)                                        # (M, 64) f32

        # feat.fc2 -> bn2 -> relu   (bf16 MXU operands optional, f32 accumulation)
        h2 = jnp.dot(h1.astype(mxu_dtype), w2_ref[...],
                     preferred_element_type=jnp.float32)
        h2 = jnp.maximum(h2 + c2_ref[...], 0.0)                          # (M, 128) f32

        # feat.fc3 -> bn3 (no relu): per-point feature
        h3 = jnp.dot(h2.astype(mxu_dtype), w3_ref[...],
                     preferred_element_type=jnp.float32)
        h3 = h3 + c3_ref[...]                                            # (M, 256) f32

        h3b = h3.reshape(Bt, TN, 256)
        if return_pf:
            pf_ref[...] = h3b.astype(pf_ref.dtype)

        # running global max-pool over points (torch.max(x, 1)), f32 accumulation
        gmax_ref[...] = jnp.maximum(gmax_ref[...], jnp.max(h3b, axis=1))  # (Bt, 256)

        @pl.when(t == nt - 1)
        def _():
            g = gmax_ref[...]                                            # (Bt, 256)

            # classifier fc1 -> bn1 -> relu
            h4 = jnp.dot(g.astype(mxu_dtype), w4_ref[...],
                         preferred_element_type=jnp.float32)
            h4 = jnp.maximum(h4 + c4_ref[...], 0.0)                      # (Bt, 128) f32

            # classifier fc2 -> log_softmax over the lane-dense padded slab.
            # Padding columns: zero weights + bias -1e30  =>  exp() underflows to 0,
            # so the real columns' log-softmax is unchanged.
            logits = jnp.dot(h4.astype(mxu_dtype), w5_ref[...],
                             preferred_element_type=jnp.float32) + b5_ref[...]
            m = jnp.max(logits, axis=-1, keepdims=True)
            lse = jnp.log(jnp.sum(jnp.exp(logits - m), axis=-1, keepdims=True)) + m
            logp_ref[...] = (logits - lse).astype(logp_ref.dtype).reshape(logp_ref.shape)

    return kernel


def pointnet_cls_256d(x, params, *, point_tile=1024, clouds_per_step=1,
                      pf_dtype=jnp.float32, mxu_dtype=jnp.float32,
                      return_point_features=True):
    """x: (B, N, 3) float32.

    Returns (log_probs (B, k), point_feat (B, N, 256) or None).
    """
    B, N, C = x.shape
    assert C == 3
    k = params["w5"].shape[1]
    d_in = params["w5"].shape[0]                       # 128
    KPAD = max(128, ((k + 127) // 128) * 128)          # lane-dense logits slab width

    # --- fold BN scales into the weights (wrapper-side, one-time) ---------------------
    w1f = (params["w1"] * params["s1"]).astype(jnp.float32)   # VPU layer stays f32
    w2f = (params["w2"] * params["s2"]).astype(mxu_dtype)
    w3f = (params["w3"] * params["s3"]).astype(mxu_dtype)
    w4f = (params["w4"] * params["s4"]).astype(mxu_dtype)
    w5p = (jnp.zeros((d_in, KPAD), jnp.float32)
           .at[:, :k].set(params["w5"].astype(jnp.float32))).astype(mxu_dtype)
    b5p = jnp.full((1, KPAD), -1e30, jnp.float32).at[:, :k].set(
        params["b5"].astype(jnp.float32))

    # --- batch tiling: keep >= 2 programs on the parallel axis (v7x megacore) ----------
    cap = max(1, min(clouds_per_step, B))
    if B >= 2:
        cap = min(cap, B // 2)
    Bt = 1
    for c in range(cap, 0, -1):
        if B % c == 0:
            Bt = c
            break
    nb = B // Bt

    # --- point tiling with pad-by-replication (max-pool invariant) ---------------------
    TN = min(point_tile, ((N + 7) // 8) * 8)
    TN = max(8, (TN // 8) * 8)
    Npad = ((N + TN - 1) // TN) * TN
    if Npad != N:
        pad = jnp.broadcast_to(x[:, :1, :], (B, Npad - N, C))
        xk = jnp.concatenate([x, pad], axis=1)
    else:
        xk = x
    nt = Npad // TN

    args = (xk, w1f, params["c1"], w2f, params["c2"], w3f, params["c3"],
            w4f, params["c4"], w5p, b5p)

    def full_spec(a):  # weights / biases: same full block at every grid step
        nd = a.ndim
        return pl.BlockSpec(a.shape, lambda b, t, _nd=nd: (0,) * _nd)

    in_specs = [pl.BlockSpec((Bt, TN, 3), lambda b, t: (b, t, 0))]
    in_specs += [full_spec(a) for a in args[1:]]

    out_specs = [pl.BlockSpec((Bt, 1, KPAD), lambda b, t: (b, 0, 0))]   # resident over t
    out_shape = [jax.ShapeDtypeStruct((B, 1, KPAD), jnp.float32)]
    if return_point_features:
        out_specs.append(pl.BlockSpec((Bt, TN, 256), lambda b, t: (b, t, 0)))
        out_shape.append(jax.ShapeDtypeStruct((B, Npad, 256), pf_dtype))

    outs = pl.pallas_call(
        _make_kernel(return_point_features, mxu_dtype),
        grid=(nb, nt),
        in_specs=in_specs,
        out_specs=tuple(out_specs),
        out_shape=tuple(out_shape),
        scratch_shapes=[pltpu.VMEM((Bt, 256), jnp.float32)],
        compiler_params=pltpu.CompilerParams(
            dimension_semantics=("parallel", "arbitrary"),
            vmem_limit_bytes=32 * 1024 * 1024,
        ),
    )(*args)

    if return_point_features:
        logp_pad, pf = outs
        pf = pf[:, :N, :]
    else:
        (logp_pad,) = outs
        pf = None

    return logp_pad.reshape(B, KPAD)[:, :k], pf


def init_params(key, k=2, dtype=jnp.float32):
    """Deterministic synthetic parameters.  BatchNorm (eval mode) is expressed as a
    per-output-channel (scale, bias) pair per layer: y = (x @ W) * scale + bias."""
    eps = 1e-5
    layer_dims = [(3, 64), (64, 128), (128, 256), (256, 128)]  # feat fc1/fc2/fc3 + cls fc1
    keys = jax.random.split(key, 2 * len(layer_dims) + 2)
    params = {}
    ki = 0
    for i, (din, dout) in enumerate(layer_dims, start=1):
        w = jax.random.normal(keys[ki], (din, dout), dtype) * 0.1; ki += 1
        b = jax.random.normal(keys[ki], (dout,), dtype) * 0.01; ki += 1
        # PyTorch BatchNorm1d defaults: gamma=1, beta=0, running_mean=0, running_var=1
        gamma = jnp.ones((dout,), dtype)
        beta = jnp.zeros((dout,), dtype)
        rmean = jnp.zeros((dout,), dtype)
        rvar = jnp.ones((dout,), dtype)
        scale = gamma / jnp.sqrt(rvar + eps)
        shift = beta - rmean * scale
        params[f"w{i}"] = w
        params[f"s{i}"] = scale.reshape(1, dout)
        params[f"c{i}"] = (b * scale + shift).reshape(1, dout)
    # classifier fc2 (128 -> k), no BatchNorm
    params["w5"] = jax.random.normal(keys[ki], (128, k), dtype) * 0.1; ki += 1
    params["b5"] = (jax.random.normal(keys[ki], (k,), dtype) * 0.01).reshape(1, k)
    return params


def _reference(x, params):
    """Pure-JAX forward pass (eval-mode BatchNorm folded the same way)."""
    h1 = jnp.maximum((x @ params["w1"]) * params["s1"] + params["c1"], 0.0)
    h2 = jnp.maximum((h1 @ params["w2"]) * params["s2"] + params["c2"], 0.0)
    h3 = (h2 @ params["w3"]) * params["s3"] + params["c3"]
    g = jnp.max(h3, axis=1)
    h4 = jnp.maximum((g @ params["w4"]) * params["s4"] + params["c4"], 0.0)
    logits = h4 @ params["w5"] + params["b5"]
    return jax.nn.log_softmax(logits, axis=-1), h3


if __name__ == "__main__":
    key = jax.random.PRNGKey(0)
    kx, kx2, kp = jax.random.split(key, 3)

    # --- small shapes: 2 clouds, 16 points, 2 classes (single N-tile path, f32) --------
    B, N, k = 2, 16, 2
    x = jax.random.normal(kx, (B, N, 3), jnp.float32)
    params = init_params(kp, k=k)

    logp, point_feat = pointnet_cls_256d(x, params)
    jax.block_until_ready((logp, point_feat))

    assert logp.shape == (B, k) and point_feat.shape == (B, N, 256)
    # log-softmax rows must exponentiate-sum to 1
    assert bool(jnp.all(jnp.abs(jnp.sum(jnp.exp(logp), axis=-1) - 1.0) < 1e-4))
    ref_logp, ref_pf = _reference(x, params)
    assert bool(jnp.allclose(logp, ref_logp, atol=1e-4, rtol=1e-4))
    assert bool(jnp.allclose(point_feat, ref_pf, atol=1e-4, rtol=1e-4))

    # --- multi-tile + pad-and-replicate path (N not a multiple of the tile) ------------
    B2, N2 = 4, 40
    x2 = jax.random.normal(kx2, (B2, N2, 3), jnp.float32)
    logp2, pf2 = pointnet_cls_256d(x2, params, point_tile=16, clouds_per_step=2)
    jax.block_until_ready((logp2, pf2))
    ref_logp2, ref_pf2 = _reference(x2, params)
    assert bool(jnp.allclose(logp2, ref_logp2, atol=1e-4, rtol=1e-4))
    assert bool(jnp.allclose(pf2, ref_pf2, atol=1e-4, rtol=1e-4))

    # --- performance configuration: bf16 MXU operands, bf16 pf (relaxed tolerance) -----
    logp3, pf3 = pointnet_cls_256d(x2, params, point_tile=16, clouds_per_step=2,
                                   mxu_dtype=jnp.bfloat16, pf_dtype=jnp.bfloat16)
    jax.block_until_ready((logp3, pf3))
    assert bool(jnp.all(jnp.abs(jnp.sum(jnp.exp(logp3), axis=-1) - 1.0) < 1e-2))
    assert bool(jnp.allclose(logp3, ref_logp2, atol=5e-2, rtol=5e-2))
    assert bool(jnp.allclose(pf3.astype(jnp.float32), ref_pf2, atol=5e-2, rtol=5e-2))

    # --- classification-only path: no per-point-feature writeback ----------------------
    logp4, pf4 = pointnet_cls_256d(x2, params, point_tile=16, clouds_per_step=2,
                                   return_point_features=False)
    jax.block_until_ready(logp4)
    assert pf4 is None
    assert bool(jnp.allclose(logp4, ref_logp2, atol=1e-4, rtol=1e-4))

    print("KERNEL_OK")
</pallas_src>

<mosaic_0001>
module attributes {stable_mosaic.version = 11 : i64} {
  func.func @kernel(%arg0: i32, %arg1: i32, %arg2: memref<1x16x3xf32, #tpu.memory_space<vmem>>, %arg3: memref<3x64xf32, #tpu.memory_space<vmem>>, %arg4: memref<1x64xf32, #tpu.memory_space<vmem>>, %arg5: memref<64x128xf32, #tpu.memory_space<vmem>>, %arg6: memref<1x128xf32, #tpu.memory_space<vmem>>, %arg7: memref<128x256xf32, #tpu.memory_space<vmem>>, %arg8: memref<1x256xf32, #tpu.memory_space<vmem>>, %arg9: memref<256x128xf32, #tpu.memory_space<vmem>>, %arg10: memref<1x128xf32, #tpu.memory_space<vmem>>, %arg11: memref<128x128xf32, #tpu.memory_space<vmem>>, %arg12: memref<1x128xf32, #tpu.memory_space<vmem>>, %arg13: memref<1x1x128xf32, #tpu.memory_space<vmem>>, %arg14: memref<1x16x256xf32, #tpu.memory_space<vmem>>, %arg15: memref<1x256xf32, #tpu.memory_space<vmem>>) attributes {dimension_semantics = [#tpu.dimension_semantics<parallel>, #tpu.dimension_semantics<arbitrary>], iteration_bounds = array<i64: 2, 1>, scalar_prefetch = 0 : i64, scratch_operands = 1 : i64, tpu.core_type = #tpu.core_type<tc>, window_params = [{transform_indices = @transform_0, window_bounds = array<i64: 1, 16, 3>}, {pipeline_mode = #tpu.pipeline_mode<synchronous>, transform_indices = @transform_1, window_bounds = array<i64: 3, 64>}, {pipeline_mode = #tpu.pipeline_mode<synchronous>, transform_indices = @transform_2, window_bounds = array<i64: 1, 64>}, {pipeline_mode = #tpu.pipeline_mode<synchronous>, transform_indices = @transform_3, window_bounds = array<i64: 64, 128>}, {pipeline_mode = #tpu.pipeline_mode<synchronous>, transform_indices = @transform_4, window_bounds = array<i64: 1, 128>}, {pipeline_mode = #tpu.pipeline_mode<synchronous>, transform_indices = @transform_5, window_bounds = array<i64: 128, 256>}, {pipeline_mode = #tpu.pipeline_mode<synchronous>, transform_indices = @transform_6, window_bounds = array<i64: 1, 256>}, {pipeline_mode = #tpu.pipeline_mode<synchronous>, transform_indices = @transform_7, window_bounds = array<i64: 256, 128>}, {pipeline_mode = #tpu.pipeline_mode<synchronous>, transform_indices = @transform_8, window_bounds = array<i64: 1, 128>}, {pipeline_mode = #tpu.pipeline_mode<synchronous>, transform_indices = @transform_9, window_bounds = array<i64: 128, 128>}, {pipeline_mode = #tpu.pipeline_mode<synchronous>, transform_indices = @transform_10, window_bounds = array<i64: 1, 128>}, {transform_indices = @transform_11, window_bounds = array<i64: 1, 1, 128>}, {transform_indices = @transform_12, window_bounds = array<i64: 1, 16, 256>}]} {
    %c0_i32 = arith.constant 0 : i32
    %0 = arith.cmpi eq, %arg1, %c0_i32 : i32
    %1 = arith.extui %0 : i1 to i32
    %c0_i32_0 = arith.constant 0 : i32
    %2 = arith.cmpi ne, %1, %c0_i32_0 : i32
    scf.if %2 {
      %cst_28 = arith.constant 0xFF800000 : f32
      %49 = vector.broadcast %cst_28 : f32 to vector<1x256xf32>
      %c0_29 = arith.constant 0 : index
      %c0_30 = arith.constant 0 : index
      %50 = vector.load %arg15[%c0_29, %c0_30] : memref<1x256xf32, #tpu.memory_space<vmem>>, vector<1x256xf32>
      tpu.vector_store %arg15[%c0_29, %c0_30], %49 {strides = array<i32>} : memref<1x256xf32, #tpu.memory_space<vmem>>, vector<1x256xf32>,
    } else {
    }
    %c0 = arith.constant 0 : index
    %c0_1 = arith.constant 0 : index
    %c0_2 = arith.constant 0 : index
    %3 = vector.load %arg2[%c0, %c0_1, %c0_2] : memref<1x16x3xf32, #tpu.memory_space<vmem>>, vector<1x16x3xf32>
    %4 = vector.shape_cast %3 : vector<1x16x3xf32> to vector<16x3xf32>
    %c0_3 = arith.constant 0 : index
    %c0_4 = arith.constant 0 : index
    %5 = vector.load %arg3[%c0_3, %c0_4] : memref<3x64xf32, #tpu.memory_space<vmem>>, vector<3x64xf32>
    %6 = vector.extract_strided_slice %4 {offsets = [0, 0], sizes = [16, 1], strides = [1, 1]} : vector<16x3xf32> to vector<16x1xf32>
    %7 = vector.extract_strided_slice %5 {offsets = [0, 0], sizes = [1, 64], strides = [1, 1]} : vector<3x64xf32> to vector<1x64xf32>
    %8 = vector.broadcast %6 : vector<16x1xf32> to vector<16x64xf32>
    %9 = vector.broadcast %7 : vector<1x64xf32> to vector<16x64xf32>
    %10 = arith.mulf %8, %9 : vector<16x64xf32>
    %11 = vector.extract_strided_slice %4 {offsets = [0, 1], sizes = [16, 1], strides = [1, 1]} : vector<16x3xf32> to vector<16x1xf32>
    %12 = vector.extract_strided_slice %5 {offsets = [1, 0], sizes = [1, 64], strides = [1, 1]} : vector<3x64xf32> to vector<1x64xf32>
    %13 = vector.broadcast %11 : vector<16x1xf32> to vector<16x64xf32>
    %14 = vector.broadcast %12 : vector<1x64xf32> to vector<16x64xf32>
    %15 = arith.mulf %13, %14 : vector<16x64xf32>
    %16 = arith.addf %10, %15 : vector<16x64xf32>
    %17 = vector.extract_strided_slice %4 {offsets = [0, 2], sizes = [16, 1], strides = [1, 1]} : vector<16x3xf32> to vector<16x1xf32>
    %18 = vector.extract_strided_slice %5 {offsets = [2, 0], sizes = [1, 64], strides = [1, 1]} : vector<3x64xf32> to vector<1x64xf32>
    %19 = vector.broadcast %17 : vector<16x1xf32> to vector<16x64xf32>
    %20 = vector.broadcast %18 : vector<1x64xf32> to vector<16x64xf32>
    %21 = arith.mulf %19, %20 : vector<16x64xf32>
    %22 = arith.addf %16, %21 : vector<16x64xf32>
    %c0_5 = arith.constant 0 : index
    %c0_6 = arith.constant 0 : index
    %23 = vector.load %arg4[%c0_5, %c0_6] : memref<1x64xf32, #tpu.memory_space<vmem>>, vector<1x64xf32>
    %24 = vector.broadcast %23 : vector<1x64xf32> to vector<16x64xf32>
    %25 = arith.addf %22, %24 : vector<16x64xf32>
    %cst = arith.constant 0.000000e+00 : f32
    %26 = vector.broadcast %cst : f32 to vector<16x64xf32>
    %27 = arith.maximumf %25, %26 : vector<16x64xf32>
    %c0_7 = arith.constant 0 : index
    %c0_8 = arith.constant 0 : index
    %28 = vector.load %arg5[%c0_7, %c0_8] : memref<64x128xf32, #tpu.memory_space<vmem>>, vector<64x128xf32>
    %cst_9 = arith.constant dense<0.000000e+00> : vector<16x128xf32>
    %29 = tpu.matmul %27, %28, %cst_9 {dimension_numbers = #tpu.dot_dimension_numbers<[1], [0], [0], [1], [0, 0, 1, 1], [], []>} : vector<16x64xf32>, vector<64x128xf32>, vector<16x128xf32> -> vector<16x128xf32>
    %c0_10 = arith.constant 0 : index
    %c0_11 = arith.constant 0 : index
    %30 = vector.load %arg6[%c0_10, %c0_11] : memref<1x128xf32, #tpu.memory_space<vmem>>, vector<1x128xf32>
    %31 = vector.broadcast %30 : vector<1x128xf32> to vector<16x128xf32>
    %32 = arith.addf %29, %31 : vector<16x128xf32>
    %cst_12 = arith.constant 0.000000e+00 : f32
    %33 = vector.broadcast %cst_12 : f32 to vector<16x128xf32>
    %34 = arith.maximumf %32, %33 : vector<16x128xf32>
    %c0_13 = arith.constant 0 : index
    %c0_14 = arith.constant 0 : index
    %35 = vector.load %arg7[%c0_13, %c0_14] : memref<128x256xf32, #tpu.memory_space<vmem>>, vector<128x256xf32>
    %cst_15 = arith.constant dense<0.000000e+00> : vector<16x256xf32>
    %36 = tpu.matmul %34, %35, %cst_15 {dimension_numbers = #tpu.dot_dimension_numbers<[1], [0], [0], [1], [0, 0, 1, 1], [], []>} : vector<16x128xf32>, vector<128x256xf32>, vector<16x256xf32> -> vector<16x256xf32>
    %c0_16 = arith.constant 0 : index
    %c0_17 = arith.constant 0 : index
    %37 = vector.load %arg8[%c0_16, %c0_17] : memref<1x256xf32, #tpu.memory_space<vmem>>, vector<1x256xf32>
    %38 = vector.broadcast %37 : vector<1x256xf32> to vector<16x256xf32>
    %39 = arith.addf %36, %38 : vector<16x256xf32>
    %40 = vector.shape_cast %39 : vector<16x256xf32> to vector<1x16x256xf32>
    %c0_18 = arith.constant 0 : index
    %c0_19 = arith.constant 0 : index
    %c0_20 = arith.constant 0 : index
    %41 = vector.load %arg14[%c0_18, %c0_19, %c0_20] : memref<1x16x256xf32, #tpu.memory_space<vmem>>, vector<1x16x256xf32>
    tpu.vector_store %arg14[%c0_18, %c0_19, %c0_20], %40 {strides = array<i32>} : memref<1x16x256xf32, #tpu.memory_space<vmem>>, vector<1x16x256xf32>,
    %c0_21 = arith.constant 0 : index
    %c0_22 = arith.constant 0 : index
    %42 = vector.load %arg15[%c0_21, %c0_22] : memref<1x256xf32, #tpu.memory_space<vmem>>, vector<1x256xf32>
    %cst_23 = arith.constant dense<0xFF800000> : vector<1x256xf32>
    %43 = vector.multi_reduction <maximumf>, %40, %cst_23 [1] : vector<1x16x256xf32> to vector<1x256xf32>
    %44 = arith.maximumf %42, %43 : vector<1x256xf32>
    %c0_24 = arith.constant 0 : index
    %c0_25 = arith.constant 0 : index
    %45 = vector.load %arg15[%c0_24, %c0_25] : memref<1x256xf32, #tpu.memory_space<vmem>>, vector<1x256xf32>
    tpu.vector_store %arg15[%c0_24, %c0_25], %44 {strides = array<i32>} : memref<1x256xf32, #tpu.memory_space<vmem>>, vector<1x256xf32>,
    %c0_i32_26 = arith.constant 0 : i32
    %46 = arith.cmpi eq, %arg1, %c0_i32_26 : i32
    %47 = arith.extui %46 : i1 to i32
    %c0_i32_27 = arith.constant 0 : i32
    %48 = arith.cmpi ne, %47, %c0_i32_27 : i32
    scf.if %48 {
      %c0_28 = arith.constant 0 : index
      %c0_29 = arith.constant 0 : index
      %49 = vector.load %arg15[%c0_28, %c0_29] : memref<1x256xf32, #tpu.memory_space<vmem>>, vector<1x256xf32>
      %c0_30 = arith.constant 0 : index
      %c0_31 = arith.constant 0 : index
      %50 = vector.load %arg9[%c0_30, %c0_31] : memref<256x128xf32, #tpu.memory_space<vmem>>, vector<256x128xf32>
      %cst_32 = arith.constant dense<0.000000e+00> : vector<1x128xf32>
      %51 = tpu.matmul %49, %50, %cst_32 {dimension_numbers = #tpu.dot_dimension_numbers<[1], [0], [0], [1], [0, 0, 1, 1], [], []>} : vector<1x256xf32>, vector<256x128xf32>, vector<1x128xf32> -> vector<1x128xf32>
      %c0_33 = arith.constant 0 : index
      %c0_34 = arith.constant 0 : index
      %52 = vector.load %arg10[%c0_33, %c0_34] : memref<1x128xf32, #tpu.memory_space<vmem>>, vector<1x128xf32>
      %53 = arith.addf %51, %52 : vector<1x128xf32>
      %cst_35 = arith.constant 0.000000e+00 : f32
      %54 = vector.broadcast %cst_35 : f32 to vector<1x128xf32>
      %55 = arith.maximumf %53, %54 : vector<1x128xf32>
      %c0_36 = arith.constant 0 : index
      %c0_37 = arith.constant 0 : index
      %56 = vector.load %arg11[%c0_36, %c0_37] : memref<128x128xf32, #tpu.memory_space<vmem>>, vector<128x128xf32>
      %cst_38 = arith.constant dense<0.000000e+00> : vector<1x128xf32>
      %57 = tpu.matmul %55, %56, %cst_38 {dimension_numbers = #tpu.dot_dimension_numbers<[1], [0], [0], [1], [0, 0, 1, 1], [], []>} : vector<1x128xf32>, vector<128x128xf32>, vector<1x128xf32> -> vector<1x128xf32>
      %c0_39 = arith.constant 0 : index
      %c0_40 = arith.constant 0 : index
      %58 = vector.load %arg12[%c0_39, %c0_40] : memref<1x128xf32, #tpu.memory_space<vmem>>, vector<1x128xf32>
      %59 = arith.addf %57, %58 : vector<1x128xf32>
      %cst_41 = arith.constant dense<0xFF800000> : vector<1xf32>
      %60 = vector.multi_reduction <maximumf>, %59, %cst_41 [1] : vector<1x128xf32> to vector<1xf32>
      %61 = vector.shape_cast %60 : vector<1xf32> to vector<1x1xf32>
      %62 = vector.broadcast %61 : vector<1x1xf32> to vector<1x128xf32>
      %63 = arith.subf %59, %62 : vector<1x128xf32>
      %64 = math.exp %63 : vector<1x128xf32>
      %cst_42 = arith.constant dense<0.000000e+00> : vector<1xf32>
      %65 = vector.multi_reduction <add>, %64, %cst_42 [1] : vector<1x128xf32> to vector<1xf32>
      %66 = vector.shape_cast %65 : vector<1xf32> to vector<1x1xf32>
      %67 = math.log %66 : vector<1x1xf32>
      %68 = arith.addf %67, %61 : vector<1x1xf32>
      %69 = vector.broadcast %68 : vector<1x1xf32> to vector<1x128xf32>
      %70 = arith.subf %59, %69 : vector<1x128xf32>
      %71 = vector.shape_cast %70 : vector<1x128xf32> to vector<1x1x128xf32>
      %c0_43 = arith.constant 0 : index
      %c0_44 = arith.constant 0 : index
      %c0_45 = arith.constant 0 : index
      %72 = vector.load %arg13[%c0_43, %c0_44, %c0_45] : memref<1x1x128xf32, #tpu.memory_space<vmem>>, vector<1x1x128xf32>
      tpu.vector_store %arg13[%c0_43, %c0_44, %c0_45], %71 {strides = array<i32>} : memref<1x1x128xf32, #tpu.memory_space<vmem>>, vector<1x1x128xf32>,
    } else {
    }
    return
  }
  func.func @transform_0(%arg0: i32, %arg1: i32) -> (i32, i32, i32) {
    %c0_i32 = arith.constant 0 : i32
    %c0_i32_0 = arith.constant 0 : i32
    return %arg0, %arg1, %c0_i32 : i32, i32, i32
  }
  func.func @transform_1(%arg0: i32, %arg1: i32) -> (i32, i32) {
    %c0_i32 = arith.constant 0 : i32
    %c0_i32_0 = arith.constant 0 : i32
    %c0_i32_1 = arith.constant 0 : i32
    return %c0_i32, %c0_i32_0 : i32, i32
  }
  func.func @transform_2(%arg0: i32, %arg1: i32) -> (i32, i32) {
    %c0_i32 = arith.constant 0 : i32
    %c0_i32_0 = arith.constant 0 : i32
    %c0_i32_1 = arith.constant 0 : i32
    return %c0_i32, %c0_i32_0 : i32, i32
  }
  func.func @transform_3(%arg0: i32, %arg1: i32) -> (i32, i32) {
    %c0_i32 = arith.constant 0 : i32
    %c0_i32_0 = arith.constant 0 : i32
    %c0_i32_1 = arith.constant 0 : i32
    return %c0_i32, %c0_i32_0 : i32, i32
  }
  func.func @transform_4(%arg0: i32, %arg1: i32) -> (i32, i32) {
    %c0_i32 = arith.constant 0 : i32
    %c0_i32_0 = arith.constant 0 : i32
    %c0_i32_1 = arith.constant 0 : i32
    return %c0_i32, %c0_i32_0 : i32, i32
  }
  func.func @transform_5(%arg0: i32, %arg1: i32) -> (i32, i32) {
    %c0_i32 = arith.constant 0 : i32
    %c0_i32_0 = arith.constant 0 : i32
    %c0_i32_1 = arith.constant 0 : i32
    return %c0_i32, %c0_i32_0 : i32, i32
  }
  func.func @transform_6(%arg0: i32, %arg1: i32) -> (i32, i32) {
    %c0_i32 = arith.constant 0 : i32
    %c0_i32_0 = arith.constant 0 : i32
    %c0_i32_1 = arith.constant 0 : i32
    return %c0_i32, %c0_i32_0 : i32, i32
  }
  func.func @transform_7(%arg0: i32, %arg1: i32) -> (i32, i32) {
    %c0_i32 = arith.constant 0 : i32
    %c0_i32_0 = arith.constant 0 : i32
    %c0_i32_1 = arith.constant 0 : i32
    return %c0_i32, %c0_i32_0 : i32, i32
  }
  func.func @transform_8(%arg0: i32, %arg1: i32) -> (i32, i32) {
    %c0_i32 = arith.constant 0 : i32
    %c0_i32_0 = arith.constant 0 : i32
    %c0_i32_1 = arith.constant 0 : i32
    return %c0_i32, %c0_i32_0 : i32, i32
  }
  func.func @transform_9(%arg0: i32, %arg1: i32) -> (i32, i32) {
    %c0_i32 = arith.constant 0 : i32
    %c0_i32_0 = arith.constant 0 : i32
    %c0_i32_1 = arith.constant 0 : i32
    return %c0_i32, %c0_i32_0 : i32, i32
  }
  func.func @transform_10(%arg0: i32, %arg1: i32) -> (i32, i32) {
    %c0_i32 = arith.constant 0 : i32
    %c0_i32_0 = arith.constant 0 : i32
    %c0_i32_1 = arith.constant 0 : i32
    return %c0_i32, %c0_i32_0 : i32, i32
  }
  func.func @transform_11(%arg0: i32, %arg1: i32) -> (i32, i32, i32) {
    %c0_i32 = arith.constant 0 : i32
    %c0_i32_0 = arith.constant 0 : i32
    %c0_i32_1 = arith.constant 0 : i32
    return %arg0, %c0_i32, %c0_i32_0 : i32, i32, i32
  }
  func.func @transform_12(%arg0: i32, %arg1: i32) -> (i32, i32, i32) {
    %c0_i32 = arith.constant 0 : i32
    %c0_i32_0 = arith.constant 0 : i32
    return %arg0, %arg1, %c0_i32 : i32, i32, i32
  }
}

</mosaic_0001>

<llo_original>
// kernel: tpu_custom_call.1
$region0: #{tpu_custom_call.1}
  #allocation0 [shape = 'u32[]', space=smem, size = 0x4, offset = 0x4, fixed_abs, tag = 'smem constant byte address 0x4 - core index']
  #allocation1 [shape = 'u32[144,128]{1,0:T(1,128)}', space=vmem, size = 0x12000, scoped, tag = 'internal scratch']
  #allocation2 [shape = 'f32[1,256]{1,0:T(1,128)}', space=vmem, size = 0x400, scoped, tag = 'scratch operand']
  %s0 = inlined_call_operand.vmem [shape: f32[2,16,3], index: 0, kind: input, shape index: {}]
  %s1 = inlined_call_operand.vmem [shape: f32[3,64], index: 1, kind: input, shape index: {}]
  %s2 = inlined_call_operand.vmem [shape: f32[1,64], index: 2, kind: input, shape index: {}]
  %s3 = inlined_call_operand.hbm [shape: f32[64,128], index: 3, kind: input, shape index: {}]
  %s4 = inlined_call_operand.vmem [shape: f32[1,128], index: 4, kind: input, shape index: {}]
  %s5 = inlined_call_operand.hbm [shape: f32[128,256], index: 5, kind: input, shape index: {}]
  %s6 = inlined_call_operand.vmem [shape: f32[1,256], index: 6, kind: input, shape index: {}]
  %s7 = inlined_call_operand.hbm [shape: f32[256,128], index: 7, kind: input, shape index: {}]
  %s8 = inlined_call_operand.vmem [shape: f32[1,128], index: 8, kind: input, shape index: {}]
  %s9 = inlined_call_operand.hbm [shape: f32[128,128], index: 9, kind: input, shape index: {}]
  %s10 = inlined_call_operand.vmem [shape: f32[1,128], index: 10, kind: input, shape index: {}]
  %s11 = inlined_call_operand.hbm [shape: f32[2,1,128], index: 11, kind: output, shape index: {0}]
  %s12 = inlined_call_operand.hbm [shape: f32[2,16,256], index: 12, kind: output, shape index: {1}]
  %13 = xla_tuple %s11, %s12
  %s14 = sld [smem:[#allocation0]]
  $region109: #{tpu_custom_call.1} parent=0
    _
  %s16 = ssub.s32 1, %s14
  %s17 = scalar_select 0, %s16, %s14
  $region1: #{tpu_custom_call.1} parent=0
    #allocation3 [shape = 'u8[32768]{0}', space=vmem, size = 0x8000, scoped, tag = 'input window, operand 3, single buffered']
    #allocation4 [shape = 's32[2]{0}', space=sflag, size = 0x8, scoped, tag = 'scoped memory for tpu_custom_call.1']
    #allocation5 [shape = 's32[2]{0}', space=sflag, size = 0x8, scoped, tag = 'scoped memory for tpu_custom_call.1']
    #allocation6 [shape = 'u8[131072]{0}', space=vmem, size = 0x20000, scoped, tag = 'input window, operand 5, single buffered']
    #allocation7 [shape = 's32[1]{0}', space=sflag, size = 0x4, scoped, tag = 'scoped memory for tpu_custom_call.1']
    #allocation8 [shape = 'u8[131072]{0}', space=vmem, size = 0x20000, scoped, tag = 'input window, operand 7, single buffered']
    #allocation9 [shape = 'u8[65536]{0}', space=vmem, size = 0x10000, scoped, tag = 'input window, operand 9, single buffered']
    #allocation10 [shape = 's32[1]{0}', space=sflag, size = 0x4, scoped, tag = 'scoped memory for tpu_custom_call.1']
    #allocation11 [shape = 'u8[1024]{0}', space=vmem, size = 0x400, scoped, tag = 'output window, operand 0']
    #allocation12 [shape = 'u8[32768]{0}', space=vmem, size = 0x8000, scoped, tag = 'output window, operand 1']
    #allocation13 [shape = 's32[2]{0}', space=sflag, size = 0x8, scoped, tag = 'scoped memory for tpu_custom_call.1']
    %18 = vsyncpa [#allocation4], 0
    %19 = vsyncpa [#allocation7], 0
    %20 = vsyncpa [#allocation10], 0
    %21 = vsyncpa [#allocation5], 0
    %s22 = scalar_lea.sflag [#allocation5], 1
    %23 = vsyncpa %s22, 0
    %24 = vsyncpa [#allocation13], 0
    %s25 = scalar_lea.sflag [#allocation13], 1
    %26 = vsyncpa %s25, 0
    loop: start=0, step=1, limit=4
    $region2: #{tpu_custom_call.1} parent=1 // loop_pre_header
      _
    $region3: #{tpu_custom_call.1} parent=1 // loop_header
      %s28 = sphi 0, %s32
      %p29 = scmp.ge.s32.totalorder %s28, 4
      %s35 = sphi 0, %s47
      %s36 = sphi 0, %s43
      %s37 = sphi 0, %s35
      %s38 = sphi 0, %s36
      %s39 = sphi 0, %s37
      %s40 = sphi 0, %s38
      %s52 = sphi 0, %s54
      %s55 = sphi 0, %s52
      %s56 = sphi 0, %s55
      %s72 = sphi 0, %s56
      %s76 = sphi 0, %s76
      %s78 = sphi 0, %s76
      %s79 = sphi 0, %s78
      %s93 = sphi 0, %s79
      %s97 = sphi 0, %s97
      %s99 = sphi 0, %s97
      %s100 = sphi 0, %s99
      %s114 = sphi 0, %s100
      %s118 = sphi 0, %s118
      %s120 = sphi 0, %s118
      %s121 = sphi 0, %s120
      %s135 = sphi 0, %s121
      %s139 = sphi 0, %s139
      %s141 = sphi 0, %s139
      %s142 = sphi 0, %s141
      %s156 = sphi 0, %s142
      %s160 = sphi 0, %s160
      %s162 = sphi 0, %s160
      %s163 = sphi 0, %s162
      %s177 = sphi 0, %s163
      %s181 = sphi 0, %s181
      %s183 = sphi 0, %s181
      %s184 = sphi 0, %s183
      %s198 = sphi 0, %s184
      %s202 = sphi 0, %s202
      %s204 = sphi 0, %s202
      %s205 = sphi 0, %s204
      %s219 = sphi 0, %s205
      %s223 = sphi 0, %s223
      %s225 = sphi 0, %s223
      %s226 = sphi 0, %s225
      %s240 = sphi 0, %s226
      %s244 = sphi 0, %s244
      %s246 = sphi 0, %s244
      %s247 = sphi 0, %s246
      %s261 = sphi 0, %s247
      %s265 = sphi 0, %s265
      %s267 = sphi 0, %s265
      %s268 = sphi 0, %s267
      %s282 = sphi 0, %s268
      %s288 = sphi 0, %s290
      %s291 = sphi 0, %s288
      %s292 = sphi 0, %s291
      %s308 = sphi 0, %s292
      %s316 = sphi 0, %s318
      %s319 = sphi 0, %s316
      %s320 = sphi 0, %s319
      %s336 = sphi 0, %s320
    $region4: #{tpu_custom_call.1} parent=1 // loop_header_branch
      %31 = sbr.rel (%p29) target = $region8
    $region5: #{tpu_custom_call.1} parent=1 // loop_body
      %s33 = ssub.s32 %s28, 1
      %s34 = ssub.s32 %s28, 2
      %s41 = sadd.s32 1, %s36
      %p42 = scmp.ge.s32.totalorder %s41, 1
      %s43 = scalar_select %p42, 0, %s41
      %s44 = sadd.s32 1, %s35
      %s45 = scalar_select %p42, %s44, %s35
      %p46 = scmp.ge.s32.totalorder %s45, 2
      %s47 = scalar_select %p46, 0, %s45
      %s48 = ssub.s32 %s35, %s47
      %s49 = ssub.s32 %s36, %s43
      %s50 = sor.u32 %s48, %s49
      %p51 = scmp.eq.s32.totalorder %s50, 0
      %s53 = sadd.s32 %s52, 1
      %s54 = scalar_select %p51, %s52, %s53
      %p57 = pneg %p51
      %p58 = scmp.eq.s32.totalorder %s28, 1
      %p59 = por %p57, %p58
      %p60 = scmp.ne.s32.totalorder %s52, %s55
      %p61 = scmp.eq.s32.totalorder %s28, 0
      %p62 = por %p60, %p61
      %p63 = scmp.ne.s32.totalorder %s52, %s55
      %p64 = scmp.eq.s32.totalorder %s33, 1
      %p65 = por %p63, %p64
      %p66 = scmp.ne.s32.totalorder %s55, %s56
      %p67 = scmp.eq.s32.totalorder %s33, 0
      %p68 = por %p66, %p67
      %p69 = scmp.ne.s32.totalorder %s55, %s56
      %p70 = scmp.eq.s32.totalorder %s34, 1
      %p71 = por %p69, %p70
      %p73 = scmp.ne.s32.totalorder %s56, %s72
      %p74 = scmp.eq.s32.totalorder %s34, 0
      %p75 = por %p73, %p74
      %s77 = sadd.s32 %s76, 1
      %p80 = scmp.eq.s32.totalorder %s28, 1
      %p81 = scmp.ne.s32.totalorder %s76, %s78
      %p82 = scmp.eq.s32.totalorder %s28, 0
      %p83 = por %p81, %p82
      %p84 = scmp.ne.s32.totalorder %s76, %s78
      %p85 = scmp.eq.s32.totalorder %s33, 1
      %p86 = por %p84, %p85
      %p87 = scmp.ne.s32.totalorder %s78, %s79
      %p88 = scmp.eq.s32.totalorder %s33, 0
      %p89 = por %p87, %p88
      %p90 = scmp.ne.s32.totalorder %s78, %s79
      %p91 = scmp.eq.s32.totalorder %s34, 1
      %p92 = por %p90, %p91
      %p94 = scmp.ne.s32.totalorder %s79, %s93
      %p95 = scmp.eq.s32.totalorder %s34, 0
      %p96 = por %p94, %p95
      %s98 = sadd.s32 %s97, 1
      %p101 = scmp.eq.s32.totalorder %s28, 1
      %p102 = scmp.ne.s32.totalorder %s97, %s99
      %p103 = scmp.eq.s32.totalorder %s28, 0
      %p104 = por %p102, %p103
      %p105 = scmp.ne.s32.totalorder %s97, %s99
      %p106 = scmp.eq.s32.totalorder %s33, 1
      %p107 = por %p105, %p106
      %p108 = scmp.ne.s32.totalorder %s99, %s100
      %p109 = scmp.eq.s32.totalorder %s33, 0
      %p110 = por %p108, %p109
      %p111 = scmp.ne.s32.totalorder %s99, %s100
      %p112 = scmp.eq.s32.totalorder %s34, 1
      %p113 = por %p111, %p112
      %p115 = scmp.ne.s32.totalorder %s100, %s114
      %p116 = scmp.eq.s32.totalorder %s34, 0
      %p117 = por %p115, %p116
      %s119 = sadd.s32 %s118, 1
      %p122 = scmp.eq.s32.totalorder %s28, 1
      %p123 = scmp.ne.s32.totalorder %s118, %s120
      %p124 = scmp.eq.s32.totalorder %s28, 0
      %p125 = por %p123, %p124
      %p126 = scmp.ne.s32.totalorder %s118, %s120
      %p127 = scmp.eq.s32.totalorder %s33, 1
      %p128 = por %p126, %p127
      %p129 = scmp.ne.s32.totalorder %s120, %s121
      %p130 = scmp.eq.s32.totalorder %s33, 0
      %p131 = por %p129, %p130
      %p132 = scmp.ne.s32.totalorder %s120, %s121
      %p133 = scmp.eq.s32.totalorder %s34, 1
      %p134 = por %p132, %p133
      %p136 = scmp.ne.s32.totalorder %s121, %s135
      %p137 = scmp.eq.s32.totalorder %s34, 0
      %p138 = por %p136, %p137
      %s140 = sadd.s32 %s139, 1
      %p143 = scmp.eq.s32.totalorder %s28, 1
      %p144 = scmp.ne.s32.totalorder %s139, %s141
      %p145 = scmp.eq.s32.totalorder %s28, 0
      %p146 = por %p144, %p145
      %p147 = scmp.ne.s32.totalorder %s139, %s141
      %p148 = scmp.eq.s32.totalorder %s33, 1
      %p149 = por %p147, %p148
      %p150 = scmp.ne.s32.totalorder %s141, %s142
      %p151 = scmp.eq.s32.totalorder %s33, 0
      %p152 = por %p150, %p151
      %p153 = scmp.ne.s32.totalorder %s141, %s142
      %p154 = scmp.eq.s32.totalorder %s34, 1
      %p155 = por %p153, %p154
      %p157 = scmp.ne.s32.totalorder %s142, %s156
      %p158 = scmp.eq.s32.totalorder %s34, 0
      %p159 = por %p157, %p158
      %s161 = sadd.s32 %s160, 1
      %p164 = scmp.eq.s32.totalorder %s28, 1
      %p165 = scmp.ne.s32.totalorder %s160, %s162
      %p166 = scmp.eq.s32.totalorder %s28, 0
      %p167 = por %p165, %p166
      %p168 = scmp.ne.s32.totalorder %s160, %s162
      %p169 = scmp.eq.s32.totalorder %s33, 1
      %p170 = por %p168, %p169
      %p171 = scmp.ne.s32.totalorder %s162, %s163
      %p172 = scmp.eq.s32.totalorder %s33, 0
      %p173 = por %p171, %p172
      %p174 = scmp.ne.s32.totalorder %s162, %s163
      %p175 = scmp.eq.s32.totalorder %s34, 1
      %p176 = por %p174, %p175
      %p178 = scmp.ne.s32.totalorder %s163, %s177
      %p179 = scmp.eq.s32.totalorder %s34, 0
      %p180 = por %p178, %p179
      %s182 = sadd.s32 %s181, 1
      %p185 = scmp.eq.s32.totalorder %s28, 1
      %p186 = scmp.ne.s32.totalorder %s181, %s183
      %p187 = scmp.eq.s32.totalorder %s28, 0
      %p188 = por %p186, %p187
      %p189 = scmp.ne.s32.totalorder %s181, %s183
      %p190 = scmp.eq.s32.totalorder %s33, 1
      %p191 = por %p189, %p190
      %p192 = scmp.ne.s32.totalorder %s183, %s184
      %p193 = scmp.eq.s32.totalorder %s33, 0
      %p194 = por %p192, %p193
      %p195 = scmp.ne.s32.totalorder %s183, %s184
      %p196 = scmp.eq.s32.totalorder %s34, 1
      %p197 = por %p195, %p196
      %p199 = scmp.ne.s32.totalorder %s184, %s198
      %p200 = scmp.eq.s32.totalorder %s34, 0
      %p201 = por %p199, %p200
      %s203 = sadd.s32 %s202, 1
      %p206 = scmp.eq.s32.totalorder %s28, 1
      %p207 = scmp.ne.s32.totalorder %s202, %s204
      %p208 = scmp.eq.s32.totalorder %s28, 0
      %p209 = por %p207, %p208
      %p210 = scmp.ne.s32.totalorder %s202, %s204
      %p211 = scmp.eq.s32.totalorder %s33, 1
      %p212 = por %p210, %p211
      %p213 = scmp.ne.s32.totalorder %s204, %s205
      %p214 = scmp.eq.s32.totalorder %s33, 0
      %p215 = por %p213, %p214
      %p216 = scmp.ne.s32.totalorder %s204, %s205
      %p217 = scmp.eq.s32.totalorder %s34, 1
      %p218 = por %p216, %p217
      %p220 = scmp.ne.s32.totalorder %s205, %s219
      %p221 = scmp.eq.s32.totalorder %s34, 0
      %p222 = por %p220, %p221
      %s224 = sadd.s32 %s223, 1
      %p227 = scmp.eq.s32.totalorder %s28, 1
      %p228 = scmp.ne.s32.totalorder %s223, %s225
      %p229 = scmp.eq.s32.totalorder %s28, 0
      %p230 = por %p228, %p229
      %p231 = scmp.ne.s32.totalorder %s223, %s225
      %p232 = scmp.eq.s32.totalorder %s33, 1
      %p233 = por %p231, %p232
      %p234 = scmp.ne.s32.totalorder %s225, %s226
      %p235 = scmp.eq.s32.totalorder %s33, 0
      %p236 = por %p234, %p235
      %p237 = scmp.ne.s32.totalorder %s225, %s226
      %p238 = scmp.eq.s32.totalorder %s34, 1
      %p239 = por %p237, %p238
      %p241 = scmp.ne.s32.totalorder %s226, %s240
      %p242 = scmp.eq.s32.totalorder %s34, 0
      %p243 = por %p241, %p242
      %s245 = sadd.s32 %s244, 1
      %p248 = scmp.eq.s32.totalorder %s28, 1
      %p249 = scmp.ne.s32.totalorder %s244, %s246
      %p250 = scmp.eq.s32.totalorder %s28, 0
      %p251 = por %p249, %p250
      %p252 = scmp.ne.s32.totalorder %s244, %s246
      %p253 = scmp.eq.s32.totalorder %s33, 1
      %p254 = por %p252, %p253
      %p255 = scmp.ne.s32.totalorder %s246, %s247
      %p256 = scmp.eq.s32.totalorder %s33, 0
      %p257 = por %p255, %p256
      %p258 = scmp.ne.s32.totalorder %s246, %s247
      %p259 = scmp.eq.s32.totalorder %s34, 1
      %p260 = por %p258, %p259
      %p262 = scmp.ne.s32.totalorder %s247, %s261
      %p263 = scmp.eq.s32.totalorder %s34, 0
      %p264 = por %p262, %p263
      %s266 = sadd.s32 %s265, 1
      %p269 = scmp.eq.s32.totalorder %s28, 1
      %p270 = scmp.ne.s32.totalorder %s265, %s267
      %p271 = scmp.eq.s32.totalorder %s28, 0
      %p272 = por %p270, %p271
      %p273 = scmp.ne.s32.totalorder %s265, %s267
      %p274 = scmp.eq.s32.totalorder %s33, 1
      %p275 = por %p273, %p274
      %p276 = scmp.ne.s32.totalorder %s267, %s268
      %p277 = scmp.eq.s32.totalorder %s33, 0
      %p278 = por %p276, %p277
      %p279 = scmp.ne.s32.totalorder %s267, %s268
      %p280 = scmp.eq.s32.totalorder %s34, 1
      %p281 = por %p279, %p280
      %p283 = scmp.ne.s32.totalorder %s268, %s282
      %p284 = scmp.eq.s32.totalorder %s34, 0
      %p285 = por %p283, %p284
      %s286 = ssub.s32 %s35, %s47
      %p287 = scmp.eq.s32.totalorder %s286, 0
      %s289 = sadd.s32 %s288, 1
      %s290 = scalar_select %p287, %s288, %s289
      %p293 = pneg %p287
      %p294 = scmp.eq.s32.totalorder %s28, 1
      %p295 = por %p293, %p294
      %p296 = scmp.ne.s32.totalorder %s288, %s291
      %p297 = scmp.eq.s32.totalorder %s28, 0
      %p298 = por %p296, %p297
      %p299 = scmp.ne.s32.totalorder %s288, %s291
      %p300 = scmp.eq.s32.totalorder %s33, 1
      %p301 = por %p299, %p300
      %p302 = scmp.ne.s32.totalorder %s291, %s292
      %p303 = scmp.eq.s32.totalorder %s33, 0
      %p304 = por %p302, %p303
      %p305 = scmp.ne.s32.totalorder %s291, %s292
      %p306 = scmp.eq.s32.totalorder %s34, 1
      %p307 = por %p305, %p306
      %p309 = scmp.ne.s32.totalorder %s292, %s308
      %p310 = scmp.eq.s32.totalorder %s34, 0
      %p311 = por %p309, %p310
      %s312 = ssub.s32 %s35, %s47
      %s313 = ssub.s32 %s36, %s43
      %s314 = sor.u32 %s312, %s313
      %p315 = scmp.eq.s32.totalorder %s314, 0
      %s317 = sadd.s32 %s316, 1
      %s318 = scalar_select %p315, %s316, %s317
      %p321 = pneg %p315
      %p322 = scmp.eq.s32.totalorder %s28, 1
      %p323 = por %p321, %p322
      %p324 = scmp.ne.s32.totalorder %s316, %s319
      %p325 = scmp.eq.s32.totalorder %s28, 0
      %p326 = por %p324, %p325
      %p327 = scmp.ne.s32.totalorder %s316, %s319
      %p328 = scmp.eq.s32.totalorder %s33, 1
      %p329 = por %p327, %p328
      %p330 = scmp.ne.s32.totalorder %s319, %s320
      %p331 = scmp.eq.s32.totalorder %s33, 0
      %p332 = por %p330, %p331
      %p333 = scmp.ne.s32.totalorder %s319, %s320
      %p334 = scmp.eq.s32.totalorder %s34, 1
      %p335 = por %p333, %p334
      %p337 = scmp.ne.s32.totalorder %s320, %s336
      %p338 = scmp.eq.s32.totalorder %s34, 0
      %p339 = por %p337, %p338
      %p340 = scmp.le.s32.totalorder 1, %s28
      %p341 = scmp.lt.s32.totalorder %s28, 3
      %p342 = pnand %p340, %p341
      %p343 = pneg %p342
      // Predicated region
      $region9: #{tpu_custom_call.1} parent=5 // pred_check
        _
      $region10: #{tpu_custom_call.1} parent=5 // pred_check_branch
        %345 = sbr.rel (%p342) target = $region12
      $region11: #{tpu_custom_call.1} parent=5 // pred_region
        %s346 = ssub.s32 %s28, 1
        // Predicated region
        $region13: #{tpu_custom_call.1} parent=11 // pred_check
          %p347 = pneg %p89
        $region14: #{tpu_custom_call.1} parent=11 // pred_check_branch
          %349 = sbr.rel (%p347) target = $region16
        $region15: #{tpu_custom_call.1} parent=11 // pred_region
          _
        $region16: #{tpu_custom_call.1} parent=11 // pred_fallthru
          _
        // Predicated region
        $region17: #{tpu_custom_call.1} parent=11 // pred_check
          %p350 = pneg %p110
        $region18: #{tpu_custom_call.1} parent=11 // pred_check_branch
          %352 = sbr.rel (%p350) target = $region20
        $region19: #{tpu_custom_call.1} parent=11 // pred_region
          _
        $region20: #{tpu_custom_call.1} parent=11 // pred_fallthru
          _
        // Predicated region
        $region21: #{tpu_custom_call.1} parent=11 // pred_check
          %p353 = pneg %p131
        $region22: #{tpu_custom_call.1} parent=11 // pred_check_branch
          %355 = sbr.rel (%p353) target = $region24
        $region23: #{tpu_custom_call.1} parent=11 // pred_region
          %s357 = ssub.s32 1024, 1024
          %358 = vsyncadd [#allocation4], %s357
          %s359 = sshll.u32 [#allocation3], 4
          %s360 = int_to_ptr.vmem [resolvable:$true] %s359
          %365 = dma.hbm_to_vmem [thread:$0]  %s3, 1024, %s360, [#allocation4], 128, 128, 8
        $region24: #{tpu_custom_call.1} parent=11 // pred_fallthru
          _
        // Predicated region
        $region25: #{tpu_custom_call.1} parent=11 // pred_check
          %p366 = pneg %p152
        $region26: #{tpu_custom_call.1} parent=11 // pred_check_branch
          %368 = sbr.rel (%p366) target = $region28
        $region27: #{tpu_custom_call.1} parent=11 // pred_region
          _
        $region28: #{tpu_custom_call.1} parent=11 // pred_fallthru
          _
        // Predicated region
        $region29: #{tpu_custom_call.1} parent=11 // pred_check
          %p369 = pneg %p173
        $region30: #{tpu_custom_call.1} parent=11 // pred_check_branch
          %371 = sbr.rel (%p369) target = $region32
        $region31: #{tpu_custom_call.1} parent=11 // pred_region
          %s373 = ssub.s32 4096, 4096
          %374 = vsyncadd [#allocation7], %s373
          %s375 = sshll.u32 [#allocation6], 4
          %s376 = int_to_ptr.vmem [resolvable:$true] %s375
          %381 = dma.hbm_to_vmem [thread:$0]  %s5, 4096, %s376, [#allocation7], 256, 256, 16
        $region32: #{tpu_custom_call.1} parent=11 // pred_fallthru
          _
        // Predicated region
        $region33: #{tpu_custom_call.1} parent=11 // pred_check
          %p382 = pneg %p194
        $region34: #{tpu_custom_call.1} parent=11 // pred_check_branch
          %384 = sbr.rel (%p382) target = $region36
        $region35: #{tpu_custom_call.1} parent=11 // pred_region
          _
        $region36: #{tpu_custom_call.1} parent=11 // pred_fallthru
          _
        // Predicated region
        $region37: #{tpu_custom_call.1} parent=11 // pred_check
          %p385 = pneg %p215
        $region38: #{tpu_custom_call.1} parent=11 // pred_check_branch
          %387 = sbr.rel (%p385) target = $region40
        $region39: #{tpu_custom_call.1} parent=11 // pred_region
          %s389 = ssub.s32 4096, 4096
          %390 = vsyncadd [#allocation7], %s389
          %s391 = sshll.u32 [#allocation8], 4
          %s392 = int_to_ptr.vmem [resolvable:$true] %s391
          %397 = dma.hbm_to_vmem [thread:$0]  %s7, 4096, %s392, [#allocation7], 128, 128, 8
        $region40: #{tpu_custom_call.1} parent=11 // pred_fallthru
          _
        // Predicated region
        $region41: #{tpu_custom_call.1} parent=11 // pred_check
          %p398 = pneg %p236
        $region42: #{tpu_custom_call.1} parent=11 // pred_check_branch
          %400 = sbr.rel (%p398) target = $region44
        $region43: #{tpu_custom_call.1} parent=11 // pred_region
          _
        $region44: #{tpu_custom_call.1} parent=11 // pred_fallthru
          _
        // Predicated region
        $region45: #{tpu_custom_call.1} parent=11 // pred_check
          %p401 = pneg %p257
        $region46: #{tpu_custom_call.1} parent=11 // pred_check_branch
          %403 = sbr.rel (%p401) target = $region48
        $region47: #{tpu_custom_call.1} parent=11 // pred_region
          %s405 = ssub.s32 2048, 2048
          %406 = vsyncadd [#allocation10], %s405
          %s407 = sshll.u32 [#allocation9], 4
          %s408 = int_to_ptr.vmem [resolvable:$true] %s407
          %413 = dma.hbm_to_vmem [thread:$0]  %s9, 2048, %s408, [#allocation10], 128, 128, 8
        $region48: #{tpu_custom_call.1} parent=11 // pred_fallthru
          _
        // Predicated region
        $region49: #{tpu_custom_call.1} parent=11 // pred_check
          %p414 = pneg %p278
        $region50: #{tpu_custom_call.1} parent=11 // pred_check_branch
          %416 = sbr.rel (%p414) target = $region52
        $region51: #{tpu_custom_call.1} parent=11 // pred_region
          _
        $region52: #{tpu_custom_call.1} parent=11 // pred_fallthru
          _
      $region12: #{tpu_custom_call.1} parent=5 // pred_fallthru
        _
      %p417 = scmp.lt.s32.totalorder %s28, 2
      // Predicated region
      $region53: #{tpu_custom_call.1} parent=5 // pred_check
        %p418 = pneg %p417
      $region54: #{tpu_custom_call.1} parent=5 // pred_check_branch
        %420 = sbr.rel (%p418) target = $region56
      $region55: #{tpu_custom_call.1} parent=5 // pred_region
        // Predicated region
        $region57: #{tpu_custom_call.1} parent=55 // pred_check
          %p421 = pneg %p62
        $region58: #{tpu_custom_call.1} parent=55 // pred_check_branch
          %423 = sbr.rel (%p421) target = $region60
        $region59: #{tpu_custom_call.1} parent=55 // pred_region
          %s424 = smul.u32 2, %s36
          %p425 = scmp.lt.s32.totalorder %s35, 1
          %s426 = scalar_select %p425, %s35, 1
          %p427 = scmp.lt.s32.totalorder %s424, 1
          %s428 = scalar_select %p427, %s424, 1
          %s429 = smul.addr %s426, 2
          %s430 = sadd.s32 %s428, %s429
          %s431 = smul.addr %s430, 8
          %s432 = scalar_lea.vmem %s0, %s431
          %s433 = smul.u32 2, %s36
        $region60: #{tpu_custom_call.1} parent=55 // pred_fallthru
          _
      $region56: #{tpu_custom_call.1} parent=5 // pred_fallthru
        _
      %p434 = scmp.le.s32.totalorder 1, %s28
      %p435 = scmp.lt.s32.totalorder %s28, 3
      %p436 = pnand %p434, %p435
      %p437 = pneg %p436
      // Predicated region
      $region61: #{tpu_custom_call.1} parent=5 // pred_check
        _
      $region62: #{tpu_custom_call.1} parent=5 // pred_check_branch
        %439 = sbr.rel (%p436) target = $region64
      $region63: #{tpu_custom_call.1} parent=5 // pred_region
        %s440 = ssub.s32 %s28, 1
        // Predicated region
        $region65: #{tpu_custom_call.1} parent=63 // pred_check
          %p441 = pneg %p131
        $region66: #{tpu_custom_call.1} parent=63 // pred_check_branch
          %443 = sbr.rel (%p441) target = $region68
        $region67: #{tpu_custom_call.1} parent=63 // pred_region
          %444 = dma.done [#allocation4], 1024
        $region68: #{tpu_custom_call.1} parent=63 // pred_fallthru
          _
        // Predicated region
        $region69: #{tpu_custom_call.1} parent=63 // pred_check
          %p445 = pneg %p173
        $region70: #{tpu_custom_call.1} parent=63 // pred_check_branch
          %447 = sbr.rel (%p445) target = $region72
        $region71: #{tpu_custom_call.1} parent=63 // pred_region
          %448 = dma.done [#allocation7], 4096
        $region72: #{tpu_custom_call.1} parent=63 // pred_fallthru
          _
        // Predicated region
        $region73: #{tpu_custom_call.1} parent=63 // pred_check
          %p449 = pneg %p215
        $region74: #{tpu_custom_call.1} parent=63 // pred_check_branch
          %451 = sbr.rel (%p449) target = $region76
        $region75: #{tpu_custom_call.1} parent=63 // pred_region
          %452 = dma.done [#allocation7], 4096
        $region76: #{tpu_custom_call.1} parent=63 // pred_fallthru
          _
        // Predicated region
        $region77: #{tpu_custom_call.1} parent=63 // pred_check
          %p453 = pneg %p257
        $region78: #{tpu_custom_call.1} parent=63 // pred_check_branch
          %455 = sbr.rel (%p453) target = $region80
        $region79: #{tpu_custom_call.1} parent=63 // pred_region
          %456 = dma.done [#allocation10], 2048
        $region80: #{tpu_custom_call.1} parent=63 // pred_fallthru
          _
        %s457 = smul.u32 2, %s38
        %p458 = scmp.lt.s32.totalorder %s37, 1
        %s459 = scalar_select %p458, %s37, 1
        %p460 = scmp.lt.s32.totalorder %s457, 1
        %s461 = scalar_select %p460, %s457, 1
        %s462 = smul.addr %s459, 2
        %s463 = sadd.s32 %s461, %s462
        %s464 = smul.addr %s463, 8
        %s465 = scalar_lea.vmem %s0, %s464
        %p466 = pneg %p68
        %p467 = pneg %p65
        %p468 = pneg %p89
        %p469 = pneg %p86
        %p470 = pneg %p110
        %p471 = pneg %p107
        %p472 = pneg %p131
        %p473 = pneg %p128
        %p474 = pneg %p152
        %p475 = pneg %p149
        %p476 = pneg %p173
        %p477 = pneg %p170
        %p478 = pneg %p194
        %p479 = pneg %p191
        %p480 = pneg %p215
        %p481 = pneg %p212
        %p482 = pneg %p236
        %p483 = pneg %p233
        %p484 = pneg %p257
        %p485 = pneg %p254
        %p486 = pneg %p278
        %p487 = pneg %p275
        %p488 = pneg %p304
        %p489 = pneg %p301
        %s490 = sand.u32 %s291, 1
        %s491 = scalar_lea.sflag [#allocation5], %s490
        %s492 = sand.u32 %s291, 1
        %s493 = scalar_lea.vmem [#allocation11], %s492
        %p494 = pneg %p332
        %p495 = pneg %p329
        %s496 = sand.u32 %s319, 1
        %s497 = scalar_lea.sflag [#allocation13], %s496
        %s498 = sand.u32 %s319, 1
        %s499 = smul.addr %s498, 32
        %s500 = scalar_lea.vmem [#allocation12], %s499
        %s501 = smul.u32 2, %s38
        %p502 = scmp.lt.s32.totalorder %s37, 1
        %s503 = scalar_select %p502, %s37, 1
        %p504 = scmp.lt.s32.totalorder %s501, 1
        %s505 = scalar_select %p504, %s501, 1
        %s506 = smul.addr %s503, 2
        %s507 = sadd.s32 %s505, %s506
        %s508 = smul.addr %s507, 8
        %s509 = scalar_lea.vmem %s0, %s508
        %s510 = smul.u32 2, %s38
        %s511 = smul.u32 2, %s38
        %p512 = scmp.eq.s32.totalorder %s38, 0
        // Predicated region
        $region81: #{tpu_custom_call.1} parent=63 // pred_check
          %p513 = pneg %p512
        $region82: #{tpu_custom_call.1} parent=63 // pred_check_branch
          %515 = sbr.rel (%p513) target = $region84
        $region83: #{tpu_custom_call.1} parent=63 // pred_region
          %v516 = vlaneseq
          %vm517 = vcmp.ge.s32.totalorder %v516, 0
          %vm518 = vcmp.lt.s32.totalorder %v516, 256
          %vm519 = vmand %vm517, %vm518
          %520 = vst.msk [vmem:[#allocation2] sm:$0x3] %vm519, -inf
        $region84: #{tpu_custom_call.1} parent=63 // pred_fallthru
          _
        %v521 = vld [vmem:[%s509] sm:$0xff]
        %v522 = vld [vmem:[%s509 + $0x8] sm:$0xff]
        %v523 = vld [vmem:[%s1] sm:$0x7]
        %525 = vset.pattern.permute.xlu0 0
        %526 = vperm.xlu0 %525, %v521
        %v527 = vpop.permute.xlu0 %526
        %530 = vset.pattern.permute.xlu0 0
        %531 = vperm.xlu0 %530, %v522
        %v532 = vpop.permute.xlu0 %531
        %v534 = vlaneseq
        %v535 = vshrl.u32 %v534, 7
        %v536 = vsub.s32 0, %v535
        %v537 = vrot.slane %v523, %v536
        %v538 = vmul.f32 %v527, %v537
        %v539 = vmul.f32 %v532, %v537
        %540 = vset.pattern.permute.xlu0 1
        %541 = vperm.xlu0 %540, %v521
        %v542 = vpop.permute.xlu0 %541
        %544 = vset.pattern.permute.xlu0 1
        %545 = vperm.xlu0 %544, %v522
        %v546 = vpop.permute.xlu0 %545
        %v548 = vlaneseq
        %v549 = vshrl.u32 %v548, 7
        %v550 = vsub.s32 1, %v549
        %v551 = vrot.slane %v523, %v550
        %v552 = vmul.f32 %v542, %v551
        %v553 = vmul.f32 %v546, %v551
        %v554 = vadd.f32 %v538, %v552
        %v555 = vadd.f32 %v539, %v553
        %556 = vset.pattern.permute.xlu0 2
        %557 = vperm.xlu0 %556, %v521
        %v558 = vpop.permute.xlu0 %557
        %560 = vset.pattern.permute.xlu0 2
        %561 = vperm.xlu0 %560, %v522
        %v562 = vpop.permute.xlu0 %561
        %v564 = vlaneseq
        %v565 = vshrl.u32 %v564, 7
        %v566 = vsub.s32 2, %v565
        %v567 = vrot.slane %v523, %v566
        %v568 = vmul.f32 %v558, %v567
        %v569 = vmul.f32 %v562, %v567
        %v570 = vadd.f32 %v554, %v568
        %v571 = vadd.f32 %v555, %v569
        %v572 = vld [vmem:[%s2] sm:$0x1]
        %v574 = vlaneseq
        %v575 = vshrl.u32 %v574, 7
        %v576 = vsub.s32 0, %v575
        %v577 = vrot.slane %v572, %v576
        %v579 = vadd.f32 %v570, %v577
        %v580 = vadd.f32 %v571, %v577
        %v581 = vmax.f32 %v579, 0.0
        %v582 = vmax.f32 %v580, 0.0
        %v583 = vld [vmem:[#allocation3] sm:$0xff]
        %v584 = vld [vmem:[#allocation3 + $0x8] sm:$0xff]
        %v585 = vld [vmem:[#allocation3 + $0x10] sm:$0xff]
        %v586 = vld [vmem:[#allocation3 + $0x18] sm:$0xff]
        %v587 = vld [vmem:[#allocation3 + $0x20] sm:$0xff]
        %v588 = vld [vmem:[#allocation3 + $0x28] sm:$0xff]
        %v589 = vld [vmem:[#allocation3 + $0x30] sm:$0xff]
        %v590 = vld [vmem:[#allocation3 + $0x38] sm:$0xff]
        %v591 = vld [vmem:[%s4] sm:$0x1]
        %v593 = vlaneseq
        %v594 = vshrl.u32 %v593, 7
        %v595 = vsub.s32 0, %v594
        %v596 = vrot.slane %v591, %v595
        %vm598 = vcmask 523264
        %v600 = vsel %vm598, %v581, 0
        %v603 = vsel %vm598, %v582, 0
        %605 = vmatprep.subr.mxu0 0.0
        %606 = vmatpush1.msra.mxu0 0.0
        %607 = vmatprep.subr.mxu0 0.0
        %608 = vmatpush1.msra.mxu0 0.0
        %609 = vmatprep.subr.mxu0 0.0
        %610 = vmatpush1.msra.mxu0 0.0
        %611 = vmatprep.subr.mxu0 0.0
        %612 = vmatpush1.msra.mxu0 0.0
        %613 = vmatprep.subr.mxu0 0.0
        %614 = vmatpush1.msra.mxu0 0.0
        %615 = vmatprep.subr.mxu0 0.0
        %616 = vmatpush1.msra.mxu0 0.0
        %617 = vmatprep.subr.mxu0 0.0
        %618 = vmatpush1.msra.mxu0 0.0
        %619 = vmatprep.subr.mxu0 0.0
        %620 = vmatpush1.msra.mxu0 0.0
        %621 = vmatprep.subr.mxu0 0.0
        %622 = vmatpush1.msra.mxu0 %v590
        %623 = vmatprep.subr.mxu0 0.0
        %624 = vmatpush1.msra.mxu0 %v589
        %625 = vmatprep.subr.mxu0 0.0
        %626 = vmatpush1.msra.mxu0 %v588
        %627 = vmatprep.subr.mxu0 0.0
        %628 = vmatpush1.msra.mxu0 %v587
        %629 = vmatprep.subr.mxu0 0.0
        %630 = vmatpush1.msra.mxu0 %v586
        %631 = vmatprep.subr.mxu0 0.0
        %632 = vmatpush1.msra.mxu0 %v585
        %633 = vmatprep.subr.mxu0 0.0
        %634 = vmatpush1.msra.mxu0 %v584
        %635 = vmatprep.subr.mxu0 0.0
        %636 = vmatpush1.msra.mxu0 %v583
        %637 = vmatprep.subr.mxu0 0.0
        %638 = vmatpush2.msra.mxu0 0.0
        %639 = vmatprep.subr.mxu0 0.0
        %640 = vmatpush2.msra.mxu0 0.0
        %641 = vmatprep.subr.mxu0 0.0
        %642 = vmatpush2.msra.mxu0 0.0
        %643 = vmatprep.subr.mxu0 0.0
        %644 = vmatpush2.msra.mxu0 0.0
        %645 = vmatprep.subr.mxu0 0.0
        %646 = vmatpush2.msra.mxu0 0.0
        %647 = vmatprep.subr.mxu0 0.0
        %648 = vmatpush2.msra.mxu0 0.0
        %649 = vmatprep.subr.mxu0 0.0
        %650 = vmatpush2.msra.mxu0 0.0
        %651 = vmatprep.subr.mxu0 0.0
        %652 = vmatpush2.msra.mxu0 0.0
        %653 = vmatprep.subr.mxu0 0.0
        %654 = vmatpush2.msra.mxu0 0.0
        %655 = vmatprep.subr.mxu0 0.0
        %656 = vmatpush2.msra.mxu0 0.0
        %657 = vmatprep.subr.mxu0 0.0
        %658 = vmatpush2.msra.mxu0 0.0
        %659 = vmatprep.subr.mxu0 0.0
        %660 = vmatpush2.msra.mxu0 0.0
        %661 = vmatprep.subr.mxu0 0.0
        %662 = vmatpush2.msra.mxu0 0.0
        %663 = vmatprep.subr.mxu0 0.0
        %664 = vmatpush2.msra.mxu0 0.0
        %665 = vmatprep.subr.mxu0 0.0
        %666 = vmatpush2.msra.mxu0 0.0
        %667 = vmatprep.subr.mxu0 0.0
        %668 = vmatpush2.msra.mxu0 0.0
        %669 = vmatprep.mubr.f32.mxu0 0.0
        %670 = vmatmul.mubr.f32.gmra.mxu0 %v600
        %v671 = vpop.f32.mrf.mxu0
        %v672 = vadd.f32 %v596, %v671
        %v673 = vpop.f32.mrf.mxu0
        %674 = vmatprep.mubr.f32.mxu0 0.0
        %675 = vmatmul.mubr.f32.gmra.mxu0 %v603
        %v676 = vpop.f32.mrf.mxu0
        %v677 = vadd.f32 %v596, %v676
        %v678 = vpop.f32.mrf.mxu0
        %679 = vdwg.mxu0
        %v680 = vmax.f32 %v672, 0.0
        %v681 = vmax.f32 %v677, 0.0
        %v682 = vld [vmem:[#allocation6] sm:$0xff]
        %v683 = vld [vmem:[#allocation6 + $0x8] sm:$0xff]
        %v684 = vld [vmem:[#allocation6 + $0x10] sm:$0xff]
        %v685 = vld [vmem:[#allocation6 + $0x18] sm:$0xff]
        %v686 = vld [vmem:[#allocation6 + $0x20] sm:$0xff]
        %v687 = vld [vmem:[#allocation6 + $0x28] sm:$0xff]
        %v688 = vld [vmem:[#allocation6 + $0x30] sm:$0xff]
        %v689 = vld [vmem:[#allocation6 + $0x38] sm:$0xff]
        %v690 = vld [vmem:[#allocation6 + $0x40] sm:$0xff]
        %v691 = vld [vmem:[#allocation6 + $0x48] sm:$0xff]
        %v692 = vld [vmem:[#allocation6 + $0x50] sm:$0xff]
        %v693 = vld [vmem:[#allocation6 + $0x58] sm:$0xff]
        %v694 = vld [vmem:[#allocation6 + $0x60] sm:$0xff]
        %v695 = vld [vmem:[#allocation6 + $0x68] sm:$0xff]
        %v696 = vld [vmem:[#allocation6 + $0x70] sm:$0xff]
        %v697 = vld [vmem:[#allocation6 + $0x78] sm:$0xff]
        %v698 = vld [vmem:[#allocation6 + $0x80] sm:$0xff]
        %v699 = vld [vmem:[#allocation6 + $0x88] sm:$0xff]
        %v700 = vld [vmem:[#allocation6 + $0x90] sm:$0xff]
        %v701 = vld [vmem:[#allocation6 + $0x98] sm:$0xff]
        %v702 = vld [vmem:[#allocation6 + $0xa0] sm:$0xff]
        %v703 = vld [vmem:[#allocation6 + $0xa8] sm:$0xff]
        %v704 = vld [vmem:[#allocation6 + $0xb0] sm:$0xff]
        %v705 = vld [vmem:[#allocation6 + $0xb8] sm:$0xff]
        %v706 = vld [vmem:[#allocation6 + $0xc0] sm:$0xff]
        %v707 = vld [vmem:[#allocation6 + $0xc8] sm:$0xff]
        %v708 = vld [vmem:[#allocation6 + $0xd0] sm:$0xff]
        %v709 = vld [vmem:[#allocation6 + $0xd8] sm:$0xff]
        %v710 = vld [vmem:[#allocation6 + $0xe0] sm:$0xff]
        %v711 = vld [vmem:[#allocation6 + $0xe8] sm:$0xff]
        %v712 = vld [vmem:[#allocation6 + $0xf0] sm:$0xff]
        %v713 = vld [vmem:[#allocation6 + $0xf8] sm:$0xff]
        %v714 = vld [vmem:[%s6] sm:$0x3]
        %v716 = vlaneseq
        %v717 = vshrl.u32 %v716, 7
        %v718 = vsub.s32 0, %v717
        %v719 = vrot.slane %v714, %v718
        %v720 = vlaneseq
        %v721 = vshrl.u32 %v720, 7
        %v722 = vsub.s32 1, %v721
        %v723 = vrot.slane %v714, %v722
        %726 = vmatprep.subr.mxu0 %v713
        %727 = vmatpush1.msra.mxu0 %v712
        %728 = vmatprep.subr.mxu0 %v711
        %729 = vmatpush1.msra.mxu0 %v710
        %730 = vmatprep.subr.mxu0 %v709
        %731 = vmatpush1.msra.mxu0 %v708
        %732 = vmatprep.subr.mxu0 %v707
        %733 = vmatpush1.msra.mxu0 %v706
        %734 = vmatprep.subr.mxu0 %v705
        %735 = vmatpush1.msra.mxu0 %v704
        %736 = vmatprep.subr.mxu0 %v703
        %737 = vmatpush1.msra.mxu0 %v702
        %738 = vmatprep.subr.mxu0 %v701
        %739 = vmatpush1.msra.mxu0 %v700
        %740 = vmatprep.subr.mxu0 %v699
        %741 = vmatpush1.msra.mxu0 %v698
        %742 = vmatprep.subr.mxu0 %v697
        %743 = vmatpush1.msra.mxu0 %v696
        %744 = vmatprep.subr.mxu0 %v695
        %745 = vmatpush1.msra.mxu0 %v694
        %746 = vmatprep.subr.mxu0 %v693
        %747 = vmatpush1.msra.mxu0 %v692
        %748 = vmatprep.subr.mxu0 %v691
        %749 = vmatpush1.msra.mxu0 %v690
        %750 = vmatprep.subr.mxu0 %v689
        %751 = vmatpush1.msra.mxu0 %v688
        %752 = vmatprep.subr.mxu0 %v687
        %753 = vmatpush1.msra.mxu0 %v686
        %754 = vmatprep.subr.mxu0 %v685
        %755 = vmatpush1.msra.mxu0 %v684
        %756 = vmatprep.subr.mxu0 %v683
        %757 = vmatpush1.msra.mxu0 %v682
        %758 = vmatprep.subr.mxu0 0.0
        %759 = vmatpush2.msra.mxu0 0.0
        %760 = vmatprep.subr.mxu0 0.0
        %761 = vmatpush2.msra.mxu0 0.0
        %762 = vmatprep.subr.mxu0 0.0
        %763 = vmatpush2.msra.mxu0 0.0
        %764 = vmatprep.subr.mxu0 0.0
        %765 = vmatpush2.msra.mxu0 0.0
        %766 = vmatprep.subr.mxu0 0.0
        %767 = vmatpush2.msra.mxu0 0.0
        %768 = vmatprep.subr.mxu0 0.0
        %769 = vmatpush2.msra.mxu0 0.0
        %770 = vmatprep.subr.mxu0 0.0
        %771 = vmatpush2.msra.mxu0 0.0
        %772 = vmatprep.subr.mxu0 0.0
        %773 = vmatpush2.msra.mxu0 0.0
        %774 = vmatprep.subr.mxu0 0.0
        %775 = vmatpush2.msra.mxu0 0.0
        %776 = vmatprep.subr.mxu0 0.0
        %777 = vmatpush2.msra.mxu0 0.0
        %778 = vmatprep.subr.mxu0 0.0
        %779 = vmatpush2.msra.mxu0 0.0
        %780 = vmatprep.subr.mxu0 0.0
        %781 = vmatpush2.msra.mxu0 0.0
        %782 = vmatprep.subr.mxu0 0.0
        %783 = vmatpush2.msra.mxu0 0.0
        %784 = vmatprep.subr.mxu0 0.0
        %785 = vmatpush2.msra.mxu0 0.0
        %786 = vmatprep.subr.mxu0 0.0
        %787 = vmatpush2.msra.mxu0 0.0
        %788 = vmatprep.subr.mxu0 0.0
        %789 = vmatpush2.msra.mxu0 0.0
        %790 = vmatprep.mubr.f32.mxu0 0.0
        %791 = vmatmul.mubr.f32.gmra.mxu0 %v680
        %v792 = vpop.f32.mrf.mxu0
        %v793 = vadd.f32 %v719, %v792
        %v794 = vpop.f32.mrf.mxu0
        %v795 = vadd.f32 %v723, %v794
        %796 = vmatprep.mubr.f32.mxu0 0.0
        %797 = vmatmul.mubr.f32.gmra.mxu0 %v681
        %v798 = vpop.f32.mrf.mxu0
        %v799 = vadd.f32 %v719, %v798
        %v800 = vpop.f32.mrf.mxu0
        %v801 = vadd.f32 %v723, %v800
        %802 = vdwg.mxu0
        %803 = vst [vmem:[%s500] sm:$0xff] %v793
        %804 = vst [vmem:[%s500 + $0x8] sm:$0xff] %v795
        %805 = vst [vmem:[%s500 + $0x10] sm:$0xff] %v799
        %806 = vst [vmem:[%s500 + $0x18] sm:$0xff] %v801
        %v807 = vld [vmem:[#allocation2] sm:$0x3]
        %v808 = vmax.f32 %v793, %v799
        %v809 = vrot.slane %v808, 4
        %v810 = vmax.f32 %v808, %v809
        %v811 = vrot.slane %v810, 2
        %v812 = vmax.f32 %v810, %v811
        %v813 = vrot.slane %v812, 1
        %v814 = vmax.f32 %v812, %v813
        %v815 = vmax.f32 %v795, %v801
        %v816 = vrot.slane %v815, 4
        %v817 = vmax.f32 %v815, %v816
        %v818 = vrot.slane %v817, 2
        %v819 = vmax.f32 %v817, %v818
        %v820 = vrot.slane %v819, 1
        %v821 = vmax.f32 %v819, %v820
        %v824 = vcombine.low %v814, %v821
        %v826 = vunpack.c.l.s4 1966171168
        %v827 = vunpack.c.0.s8 %v826
        %v828 = vlaneseq
        %v829 = vshrl.u32 %v828, 7
        %v830 = vsub.s32 %v827, %v829
        %v831 = vrot.slane %v824, %v830
        %v833 = vunpack.c.l.s4 1966171168
        %v834 = vunpack.c.0.s8 %v833
        %v835 = vlaneseq
        %v836 = vshrl.u32 %v835, 7
        %v837 = vsub.s32 %v834, %v836
        %v838 = vrot.slane %v831, %v837
        %v840 = vmax.f32 %v807, %v838
        %v841 = vlaneseq
        %vm842 = vcmp.ge.s32.totalorder %v841, 0
        %vm843 = vcmp.lt.s32.totalorder %v841, 256
        %vm844 = vmand %vm842, %vm843
        %845 = vst.msk [vmem:[#allocation2] sm:$0x3] %vm844, %v840
        // Predicated region
        $region85: #{tpu_custom_call.1} parent=63 // pred_check
          %p846 = pneg %p512
        $region86: #{tpu_custom_call.1} parent=63 // pred_check_branch
          %848 = sbr.rel (%p846) target = $region88
        $region87: #{tpu_custom_call.1} parent=63 // pred_region
          %v849 = vld [vmem:[#allocation2] sm:$0x3]
          %v850 = vld [vmem:[#allocation8] sm:$0xff]
          %v851 = vld [vmem:[#allocation8 + $0x8] sm:$0xff]
          %v852 = vld [vmem:[#allocation8 + $0x10] sm:$0xff]
          %v853 = vld [vmem:[#allocation8 + $0x18] sm:$0xff]
          %v854 = vld [vmem:[#allocation8 + $0x20] sm:$0xff]
          %v855 = vld [vmem:[#allocation8 + $0x28] sm:$0xff]
          %v856 = vld [vmem:[#allocation8 + $0x30] sm:$0xff]
          %v857 = vld [vmem:[#allocation8 + $0x38] sm:$0xff]
          %v858 = vld [vmem:[#allocation8 + $0x40] sm:$0xff]
          %v859 = vld [vmem:[#allocation8 + $0x48] sm:$0xff]
          %v860 = vld [vmem:[#allocation8 + $0x50] sm:$0xff]
          %v861 = vld [vmem:[#allocation8 + $0x58] sm:$0xff]
          %v862 = vld [vmem:[#allocation8 + $0x60] sm:$0xff]
          %v863 = vld [vmem:[#allocation8 + $0x68] sm:$0xff]
          %v864 = vld [vmem:[#allocation8 + $0x70] sm:$0xff]
          %v865 = vld [vmem:[#allocation8 + $0x78] sm:$0xff]
          %v866 = vld [vmem:[#allocation8 + $0x80] sm:$0xff]
          %v867 = vld [vmem:[#allocation8 + $0x88] sm:$0xff]
          %v868 = vld [vmem:[#allocation8 + $0x90] sm:$0xff]
          %v869 = vld [vmem:[#allocation8 + $0x98] sm:$0xff]
          %v870 = vld [vmem:[#allocation8 + $0xa0] sm:$0xff]
          %v871 = vld [vmem:[#allocation8 + $0xa8] sm:$0xff]
          %v872 = vld [vmem:[#allocation8 + $0xb0] sm:$0xff]
          %v873 = vld [vmem:[#allocation8 + $0xb8] sm:$0xff]
          %v874 = vld [vmem:[#allocation8 + $0xc0] sm:$0xff]
          %v875 = vld [vmem:[#allocation8 + $0xc8] sm:$0xff]
          %v876 = vld [vmem:[#allocation8 + $0xd0] sm:$0xff]
          %v877 = vld [vmem:[#allocation8 + $0xd8] sm:$0xff]
          %v878 = vld [vmem:[#allocation8 + $0xe0] sm:$0xff]
          %v879 = vld [vmem:[#allocation8 + $0xe8] sm:$0xff]
          %v880 = vld [vmem:[#allocation8 + $0xf0] sm:$0xff]
          %v881 = vld [vmem:[#allocation8 + $0xf8] sm:$0xff]
          %v882 = vld [vmem:[%s8] sm:$0x1]
          %v884 = vlaneseq
          %v885 = vshrl.u32 %v884, 7
          %v886 = vsub.s32 0, %v885
          %v887 = vrot.slane %v849, %v886
          %v888 = vlaneseq
          %v889 = vshrl.u32 %v888, 7
          %v890 = vsub.s32 1, %v889
          %v891 = vrot.slane %v849, %v890
          %894 = vmatprep.subr.mxu0 0.0
          %895 = vmatpush1.msra.mxu0 %v865
          %896 = vmatprep.subr.mxu0 0.0
          %897 = vmatpush1.msra.mxu0 %v864
          %898 = vmatprep.subr.mxu0 0.0
          %899 = vmatpush1.msra.mxu0 %v863
          %900 = vmatprep.subr.mxu0 0.0
          %901 = vmatpush1.msra.mxu0 %v862
          %902 = vmatprep.subr.mxu0 0.0
          %903 = vmatpush1.msra.mxu0 %v861
          %904 = vmatprep.subr.mxu0 0.0
          %905 = vmatpush1.msra.mxu0 %v860
          %906 = vmatprep.subr.mxu0 0.0
          %907 = vmatpush1.msra.mxu0 %v859
          %908 = vmatprep.subr.mxu0 0.0
          %909 = vmatpush1.msra.mxu0 %v858
          %910 = vmatprep.subr.mxu0 0.0
          %911 = vmatpush1.msra.mxu0 %v857
          %912 = vmatprep.subr.mxu0 0.0
          %913 = vmatpush1.msra.mxu0 %v856
          %914 = vmatprep.subr.mxu0 0.0
          %915 = vmatpush1.msra.mxu0 %v855
          %916 = vmatprep.subr.mxu0 0.0
          %917 = vmatpush1.msra.mxu0 %v854
          %918 = vmatprep.subr.mxu0 0.0
          %919 = vmatpush1.msra.mxu0 %v853
          %920 = vmatprep.subr.mxu0 0.0
          %921 = vmatpush1.msra.mxu0 %v852
          %922 = vmatprep.subr.mxu0 0.0
          %923 = vmatpush1.msra.mxu0 %v851
          %924 = vmatprep.subr.mxu0 0.0
          %925 = vmatpush1.msra.mxu0 %v850
          %926 = vmatprep.subr.mxu0 0.0
          %927 = vmatpush2.msra.mxu0 %v881
          %928 = vmatprep.subr.mxu0 0.0
          %929 = vmatpush2.msra.mxu0 %v880
          %930 = vmatprep.subr.mxu0 0.0
          %931 = vmatpush2.msra.mxu0 %v879
          %932 = vmatprep.subr.mxu0 0.0
          %933 = vmatpush2.msra.mxu0 %v878
          %934 = vmatprep.subr.mxu0 0.0
          %935 = vmatpush2.msra.mxu0 %v877
          %936 = vmatprep.subr.mxu0 0.0
          %937 = vmatpush2.msra.mxu0 %v876
          %938 = vmatprep.subr.mxu0 0.0
          %939 = vmatpush2.msra.mxu0 %v875
          %940 = vmatprep.subr.mxu0 0.0
          %941 = vmatpush2.msra.mxu0 %v874
          %942 = vmatprep.subr.mxu0 0.0
          %943 = vmatpush2.msra.mxu0 %v873
          %944 = vmatprep.subr.mxu0 0.0
          %945 = vmatpush2.msra.mxu0 %v872
          %946 = vmatprep.subr.mxu0 0.0
          %947 = vmatpush2.msra.mxu0 %v871
          %948 = vmatprep.subr.mxu0 0.0
          %949 = vmatpush2.msra.mxu0 %v870
          %950 = vmatprep.subr.mxu0 0.0
          %951 = vmatpush2.msra.mxu0 %v869
          %952 = vmatprep.subr.mxu0 0.0
          %953 = vmatpush2.msra.mxu0 %v868
          %954 = vmatprep.subr.mxu0 0.0
          %955 = vmatpush2.msra.mxu0 %v867
          %956 = vmatprep.subr.mxu0 0.0
          %957 = vmatpush2.msra.mxu0 %v866
          %958 = vmatprep.mubr.f32.mxu0 %v891
          %959 = vmatmul.mubr.f32.gmra.mxu0 %v887
          %v960 = vpop.f32.mrf.mxu0
          %v961 = vadd.f32 %v882, %v960
          %v962 = vpop.f32.mrf.mxu0
          %963 = vdwg.mxu0
          %v964 = vmax.f32 %v961, 0.0
          %v965 = vld [vmem:[#allocation9] sm:$0xff]
          %v966 = vld [vmem:[#allocation9 + $0x8] sm:$0xff]
          %v967 = vld [vmem:[#allocation9 + $0x10] sm:$0xff]
          %v968 = vld [vmem:[#allocation9 + $0x18] sm:$0xff]
          %v969 = vld [vmem:[#allocation9 + $0x20] sm:$0xff]
          %v970 = vld [vmem:[#allocation9 + $0x28] sm:$0xff]
          %v971 = vld [vmem:[#allocation9 + $0x30] sm:$0xff]
          %v972 = vld [vmem:[#allocation9 + $0x38] sm:$0xff]
          %v973 = vld [vmem:[#allocation9 + $0x40] sm:$0xff]
          %v974 = vld [vmem:[#allocation9 + $0x48] sm:$0xff]
          %v975 = vld [vmem:[#allocation9 + $0x50] sm:$0xff]
          %v976 = vld [vmem:[#allocation9 + $0x58] sm:$0xff]
          %v977 = vld [vmem:[#allocation9 + $0x60] sm:$0xff]
          %v978 = vld [vmem:[#allocation9 + $0x68] sm:$0xff]
          %v979 = vld [vmem:[#allocation9 + $0x70] sm:$0xff]
          %v980 = vld [vmem:[#allocation9 + $0x78] sm:$0xff]
          %v981 = vld [vmem:[%s10] sm:$0x1]
          %982 = vmatprep.subr.mxu0 0.0
          %983 = vmatpush1.msra.mxu0 %v980
          %984 = vmatprep.subr.mxu0 0.0
          %985 = vmatpush1.msra.mxu0 %v979
          %986 = vmatprep.subr.mxu0 0.0
          %987 = vmatpush1.msra.mxu0 %v978
          %988 = vmatprep.subr.mxu0 0.0
          %989 = vmatpush1.msra.mxu0 %v977
          %990 = vmatprep.subr.mxu0 0.0
          %991 = vmatpush1.msra.mxu0 %v976
          %992 = vmatprep.subr.mxu0 0.0
          %993 = vmatpush1.msra.mxu0 %v975
          %994 = vmatprep.subr.mxu0 0.0
          %995 = vmatpush1.msra.mxu0 %v974
          %996 = vmatprep.subr.mxu0 0.0
          %997 = vmatpush1.msra.mxu0 %v973
          %998 = vmatprep.subr.mxu0 0.0
          %999 = vmatpush1.msra.mxu0 %v972
          %1000 = vmatprep.subr.mxu0 0.0
          %1001 = vmatpush1.msra.mxu0 %v971
          %1002 = vmatprep.subr.mxu0 0.0
          %1003 = vmatpush1.msra.mxu0 %v970
          %1004 = vmatprep.subr.mxu0 0.0
          %1005 = vmatpush1.msra.mxu0 %v969
          %1006 = vmatprep.subr.mxu0 0.0
          %1007 = vmatpush1.msra.mxu0 %v968
          %1008 = vmatprep.subr.mxu0 0.0
          %1009 = vmatpush1.msra.mxu0 %v967
          %1010 = vmatprep.subr.mxu0 0.0
          %1011 = vmatpush1.msra.mxu0 %v966
          %1012 = vmatprep.subr.mxu0 0.0
          %1013 = vmatpush1.msra.mxu0 %v965
          %1014 = vmatprep.subr.mxu0 0.0
          %1015 = vmatpush2.msra.mxu0 0.0
          %1016 = vmatprep.subr.mxu0 0.0
          %1017 = vmatpush2.msra.mxu0 0.0
          %1018 = vmatprep.subr.mxu0 0.0
          %1019 = vmatpush2.msra.mxu0 0.0
          %1020 = vmatprep.subr.mxu0 0.0
          %1021 = vmatpush2.msra.mxu0 0.0
          %1022 = vmatprep.subr.mxu0 0.0
          %1023 = vmatpush2.msra.mxu0 0.0
          %1024 = vmatprep.subr.mxu0 0.0
          %1025 = vmatpush2.msra.mxu0 0.0
          %1026 = vmatprep.subr.mxu0 0.0
          %1027 = vmatpush2.msra.mxu0 0.0
          %1028 = vmatprep.subr.mxu0 0.0
          %1029 = vmatpush2.msra.mxu0 0.0
          %1030 = vmatprep.subr.mxu0 0.0
          %1031 = vmatpush2.msra.mxu0 0.0
          %1032 = vmatprep.subr.mxu0 0.0
          %1033 = vmatpush2.msra.mxu0 0.0
          %1034 = vmatprep.subr.mxu0 0.0
          %1035 = vmatpush2.msra.mxu0 0.0
          %1036 = vmatprep.subr.mxu0 0.0
          %1037 = vmatpush2.msra.mxu0 0.0
          %1038 = vmatprep.subr.mxu0 0.0
          %1039 = vmatpush2.msra.mxu0 0.0
          %1040 = vmatprep.subr.mxu0 0.0
          %1041 = vmatpush2.msra.mxu0 0.0
          %1042 = vmatprep.subr.mxu0 0.0
          %1043 = vmatpush2.msra.mxu0 0.0
          %1044 = vmatprep.subr.mxu0 0.0
          %1045 = vmatpush2.msra.mxu0 0.0
          %1046 = vmatprep.mubr.f32.mxu0 0.0
          %1047 = vmatmul.mubr.f32.gmra.mxu0 %v964
          %v1048 = vpop.f32.mrf.mxu0
          %v1049 = vadd.f32 %v981, %v1048
          %v1050 = vpop.f32.mrf.mxu0
          %1051 = vdwg.mxu0
          %vm1052 = vcmask 1040384
          %v1053 = vsel %vm1052, %v1049, -inf
          %1054 = vmax.xlane.f32.xlu0 %v1053
          %v1055 = vpop.xlane.xlu0 %1054
          %v1056 = vsub.f32 %v1049, %v1055
          %v1057 = vmul.f32 %v1056, 1.442695
          %v1058 = vpow.pop %v1057
          %v1059 = vsel %vm1052, %v1058, 0.0
          %1060 = vadd.xlane.f32.xlu0 %v1059
          %v1061 = vpop.xlane.xlu0 %1060
          %v1062 = vlog2.pop %v1061
          %v1063 = vmul.f32 %v1062, 0.6931472
          %v1064 = vadd.f32 %v1063, %v1055
          %v1065 = vsub.f32 %v1049, %v1064
          %1066 = vst [vmem:[%s493] sm:$0x1] %v1065
        $region88: #{tpu_custom_call.1} parent=63 // pred_fallthru
          _
        %s1067 = sand.u32 %s291, 1
        %s1068 = scalar_lea.sflag [#allocation5], %s1067
        %s1069 = sand.u32 %s291, 1
        %s1070 = scalar_lea.vmem [#allocation11], %s1069
        %s1071 = sand.u32 %s319, 1
        %s1072 = scalar_lea.sflag [#allocation13], %s1071
        %s1073 = sand.u32 %s319, 1
        %s1074 = smul.addr %s1073, 32
        %s1075 = scalar_lea.vmem [#allocation12], %s1074
        // Predicated region
        $region89: #{tpu_custom_call.1} parent=63 // pred_check
          %p1076 = pneg %p301
        $region90: #{tpu_custom_call.1} parent=63 // pred_check_branch
          %1078 = sbr.rel (%p1076) target = $region92
        $region91: #{tpu_custom_call.1} parent=63 // pred_region
          %s1080 = ssub.s32 16, 16
          %1081 = vsyncadd %s1068, %s1080
          %s1082 = smul.addr %s37, 16
          %s1083 = scalar_lea.hbm %s11, %s1082
          %s1085 = sshll.u32 %s1070, 4
          %s1086 = int_to_ptr.vmem [resolvable:$true] %s1085
          %1088 = dma.vmem_to_hbm [thread:$0]  %s1086, 16, %s1083, %s1068
        $region92: #{tpu_custom_call.1} parent=63 // pred_fallthru
          _
        // Predicated region
        $region93: #{tpu_custom_call.1} parent=63 // pred_check
          %p1089 = pneg %p329
        $region94: #{tpu_custom_call.1} parent=63 // pred_check_branch
          %1091 = sbr.rel (%p1089) target = $region96
        $region95: #{tpu_custom_call.1} parent=63 // pred_region
          %s1092 = smul.u32 2, %s38
          %s1094 = ssub.s32 512, 512
          %1095 = vsyncadd %s1072, %s1094
          %s1096 = smul.addr %s1092, 2
          %s1097 = smul.addr %s37, 4
          %s1098 = sadd.s32 %s1096, %s1097
          %s1099 = smul.addr %s1098, 128
          %s1100 = scalar_lea.hbm %s12, %s1099
          %s1101 = sshll.u32 %s1075, 4
          %s1102 = int_to_ptr.vmem [resolvable:$true] %s1101
          %1107 = dma.vmem_to_hbm [thread:$0]  %s1102, 512, %s1100, %s1072, 256, 256, 16
        $region96: #{tpu_custom_call.1} parent=63 // pred_fallthru
          _
      $region64: #{tpu_custom_call.1} parent=5 // pred_fallthru
        _
      %p1108 = scmp.le.s32.totalorder 2, %s28
      // Predicated region
      $region97: #{tpu_custom_call.1} parent=5 // pred_check
        %p1109 = pneg %p1108
      $region98: #{tpu_custom_call.1} parent=5 // pred_check_branch
        %1111 = sbr.rel (%p1109) target = $region100
      $region99: #{tpu_custom_call.1} parent=5 // pred_region
        %s1112 = ssub.s32 %s28, 2
        // Predicated region
        $region101: #{tpu_custom_call.1} parent=99 // pred_check
          %p1113 = pneg %p307
        $region102: #{tpu_custom_call.1} parent=99 // pred_check_branch
          %1115 = sbr.rel (%p1113) target = $region104
        $region103: #{tpu_custom_call.1} parent=99 // pred_region
          %s1116 = sand.u32 %s292, 1
          %s1117 = scalar_lea.sflag [#allocation5], %s1116
          %s1118 = sand.u32 %s292, 1
          %s1119 = scalar_lea.vmem [#allocation11], %s1118
          %1120 = dma.done %s1117, 16
        $region104: #{tpu_custom_call.1} parent=99 // pred_fallthru
          _
        // Predicated region
        $region105: #{tpu_custom_call.1} parent=99 // pred_check
          %p1121 = pneg %p335
        $region106: #{tpu_custom_call.1} parent=99 // pred_check_branch
          %1123 = sbr.rel (%p1121) target = $region108
        $region107: #{tpu_custom_call.1} parent=99 // pred_region
          %s1124 = sand.u32 %s320, 1
          %s1125 = scalar_lea.sflag [#allocation13], %s1124
          %s1126 = sand.u32 %s320, 1
          %s1127 = smul.addr %s1126, 32
          %s1128 = scalar_lea.vmem [#allocation12], %s1127
          %1129 = dma.done %s1125, 512
        $region108: #{tpu_custom_call.1} parent=99 // pred_fallthru
          _
      $region100: #{tpu_custom_call.1} parent=5 // pred_fallthru
        _
    $region6: #{tpu_custom_call.1} parent=1 // loop_footer
      %s32 = sadd.s32 1, %s28
    $region7: #{tpu_custom_call.1} parent=1 // loop_footer_branch
      %27 = sbr.rel target = $region3
    $region8: #{tpu_custom_call.1} parent=1 // loop_exit
      _
    %1130 = vsyncpa [#allocation4], 1
    %s1131 = scalar_lea.sflag [#allocation4], 1
    %1132 = vsyncpa %s1131, 1
    %1133 = vsyncpa [#allocation7], 1
    %1134 = vsyncpa [#allocation10], 1
    %1135 = vsyncpa [#allocation5], 1
    %s1136 = scalar_lea.sflag [#allocation5], 1
    %1137 = vsyncpa %s1136, 1
    %1138 = vsyncpa [#allocation13], 1
    %s1139 = scalar_lea.sflag [#allocation13], 1
    %1140 = vsyncpa %s1139, 1

</llo_original>
